<compile_context>
chip_gen: v7x
topology: tpu7x:2x2x1
jax: 0.10.0
libtpu: 0.0.40
codegen_flags: <defaults>
</compile_context>

<pallas_src>
import functools

import jax
import jax.numpy as jnp
from jax import lax
from jax.experimental import pallas as pl
from jax.experimental.pallas import tpu as pltpu


def shsa_kernel(x_ref, wq_ref, bq_ref, wk_ref, bk_ref, wv_ref, bv_ref,
                wp1_ref, wp2_ref, bp_ref, o_ref, *, batch, pdim, eps):
    # Small weights: load once, shared by every sample.
    wq, bq = wq_ref[...], bq_ref[...]        # [qk, pdim], [qk, 1]  (scale folded in)
    wk, bk = wk_ref[...], bk_ref[...]        # [qk, pdim], [qk, 1]
    wv, bv = wv_ref[...], bv_ref[...]        # [pdim, pdim], [pdim, 1]
    wp1, wp2, bp = wp1_ref[...], wp2_ref[...], bp_ref[...]

    n = x_ref.shape[2]
    inv_cnt = 1.0 / float(pdim * n)

    # Small static batch -> unrolled; weights stay resident, one grid step total.
    for b in range(batch):
        x = x_ref[b]                          # [dim, N]   (channels on sublanes)
        x1 = x[:pdim, :]                      # [pdim, N]  sublane slice (pdim % 8 == 0)
        x2 = x[pdim:, :]                      # [dim-pdim, N]

        # --- GroupNorm(1 group), inference: one-pass mean / E[x^2] over (pdim*N) ---
        s1 = jnp.sum(x1)
        s2 = jnp.sum(x1 * x1)
        mu = s1 * inv_cnt
        var = s2 * inv_cnt - mu * mu
        x1n = (x1 - mu) * lax.rsqrt(var + eps)   # GN affine folded into wq/wk/wv

        # --- qkv: fused 1x1 conv + BN (+ GN affine, + attn scale in wq/bq) ---
        q = jnp.dot(wq, x1n, preferred_element_type=jnp.float32) + bq   # [qk, N]
        k = jnp.dot(wk, x1n, preferred_element_type=jnp.float32) + bk   # [qk, N]
        v = jnp.dot(wv, x1n, preferred_element_type=jnp.float32) + bv   # [pdim, N]

        # --- attention: attn[i, j] = sum_c q[c, i] * k[c, j]  (scale already in q) ---
        q_rows = q.T                                                    # [N, qk] small XLU transpose
        attn = jnp.dot(q_rows, k, preferred_element_type=jnp.float32)   # [N, N]
        attn = jnp.exp(attn - jnp.max(attn, axis=-1, keepdims=True))
        inv = pl.reciprocal(jnp.sum(attn, axis=-1, keepdims=True), approx=True)
        attn = attn * inv

        # x1a[c, i] = sum_j v[c, j] * attn[i, j]   (NT form: no explicit transpose)
        x1a = lax.dot_general(v, attn, (((1,), (1,)), ((), ())),
                              preferred_element_type=jnp.float32)       # [pdim, N]

        # --- ReLU + proj 1x1 conv + BN, split weights (no concat / relayout) ---
        out = (jnp.dot(wp1, jnp.maximum(x1a, 0.0),
                       preferred_element_type=jnp.float32)
               + jnp.dot(wp2, jnp.maximum(x2, 0.0),
                         preferred_element_type=jnp.float32)
               + bp)                                                    # [dim, N]

        o_ref[b] = out.astype(o_ref.dtype)


def shsa_forward(x_nchw, kp):
    """x_nchw: [B, dim, H, W].  kp: kernel params from prepare_kernel_params."""
    B, dim, H, W = x_nchw.shape
    N = H * W
    pdim = kp["wv"].shape[0]

    # Free layout view: NCHW -> [B, dim, N].  No HBM transpose.
    x = x_nchw.reshape(B, dim, N).astype(jnp.float32)

    kernel = functools.partial(shsa_kernel, batch=B, pdim=pdim, eps=1e-5)

    def fixed(shape):
        zeros = (0,) * len(shape)
        return pl.BlockSpec(shape, lambda i, _z=zeros: _z)

    out = pl.pallas_call(
        kernel,
        out_shape=jax.ShapeDtypeStruct((B, dim, N), jnp.float32),
        grid_spec=pltpu.PrefetchScalarGridSpec(
            num_scalar_prefetch=0,
            grid=(1,),                 # batch folded inside the kernel (B is small)
            in_specs=[
                fixed((B, dim, N)),
                fixed(kp["wq"].shape), fixed(kp["bq"].shape),
                fixed(kp["wk"].shape), fixed(kp["bk"].shape),
                fixed(kp["wv"].shape), fixed(kp["bv"].shape),
                fixed(kp["wp1"].shape), fixed(kp["wp2"].shape),
                fixed(kp["bp"].shape),
            ],
            out_specs=fixed((B, dim, N)),
        ),
        compiler_params=pltpu.CompilerParams(
            dimension_semantics=("arbitrary",)),
    )(x, kp["wq"], kp["bq"], kp["wk"], kp["bk"], kp["wv"], kp["bv"],
      kp["wp1"], kp["wp2"], kp["bp"])

    # Free layout view back: [B, dim, N] -> NCHW.
    return out.reshape(B, dim, H, W)


def fuse_conv_bn(w_conv, gamma, beta, rmean, rvar, eps=1e-5):
    """1x1 conv weight [out, in] + BN (eval) -> W [out, in], bias [out]."""
    s = gamma / jnp.sqrt(rvar + eps)
    return w_conv * s[:, None], beta - rmean * s


def init_params(key, dim, qk_dim, pdim):
    qkv_dim = 2 * qk_dim + pdim
    ks = jax.random.split(key, 12)
    p = {}
    # GroupNorm affine
    p["gn_g"] = 1.0 + 0.1 * jax.random.normal(ks[0], (pdim,), jnp.float32)
    p["gn_b"] = 0.05 * jax.random.normal(ks[1], (pdim,), jnp.float32)
    # qkv Conv2d_BN
    w_qkv = 0.1 * jax.random.normal(ks[2], (qkv_dim, pdim), jnp.float32)
    g_qkv = 1.0 + 0.1 * jax.random.normal(ks[3], (qkv_dim,), jnp.float32)
    b_qkv = 0.05 * jax.random.normal(ks[4], (qkv_dim,), jnp.float32)
    m_qkv = 0.05 * jax.random.normal(ks[5], (qkv_dim,), jnp.float32)
    v_qkv = 0.5 + jax.random.uniform(ks[6], (qkv_dim,), jnp.float32)
    p["wqkv"], p["bqkv"] = fuse_conv_bn(w_qkv, g_qkv, b_qkv, m_qkv, v_qkv)
    # proj Conv2d_BN (nominally bn_weight_init=0; nonzero deterministic values used)
    w_pr = 0.1 * jax.random.normal(ks[7], (dim, dim), jnp.float32)
    g_pr = 1.0 + 0.1 * jax.random.normal(ks[8], (dim,), jnp.float32)
    b_pr = 0.05 * jax.random.normal(ks[9], (dim,), jnp.float32)
    m_pr = 0.05 * jax.random.normal(ks[10], (dim,), jnp.float32)
    v_pr = 0.5 + jax.random.uniform(ks[11], (dim,), jnp.float32)
    p["wproj"], p["bproj"] = fuse_conv_bn(w_pr, g_pr, b_pr, m_pr, v_pr)
    return p


def prepare_kernel_params(p, *, dim, qk_dim, pdim):
    """Fold GN affine + attention scale into weights; split q/k/v and proj."""
    scale = float(qk_dim) ** -0.5
    # W @ (g * xn + beta) + b  ==  (W * g) @ xn + (W @ beta + b)
    w = p["wqkv"] * p["gn_g"][None, :]                 # [qkv_dim, pdim]
    b = p["bqkv"] + p["wqkv"] @ p["gn_b"]              # [qkv_dim]
    wq, wk, wv = w[:qk_dim], w[qk_dim:2 * qk_dim], w[2 * qk_dim:]
    bq, bk, bv = b[:qk_dim], b[qk_dim:2 * qk_dim], b[2 * qk_dim:]
    return {
        "wq": wq * scale, "bq": (bq * scale)[:, None],
        "wk": wk, "bk": bk[:, None],
        "wv": wv, "bv": bv[:, None],
        "wp1": p["wproj"][:, :pdim], "wp2": p["wproj"][:, pdim:],
        "bp": p["bproj"][:, None],
    }


def shsa_reference(x, p, *, pdim, qk_dim):
    """Pure-JAX reference mirroring the PyTorch forward (NCHW, unfolded params)."""
    B, dim, H, W = x.shape
    N = H * W
    x1, x2 = x[:, :pdim], x[:, pdim:]
    mu = jnp.mean(x1, axis=(1, 2, 3), keepdims=True)
    var = jnp.mean((x1 - mu) ** 2, axis=(1, 2, 3), keepdims=True)
    x1n = (x1 - mu) / jnp.sqrt(var + 1e-5)
    x1n = x1n * p["gn_g"][None, :, None, None] + p["gn_b"][None, :, None, None]
    qkv = jnp.einsum("oc,bchw->bohw", p["wqkv"], x1n) + p["bqkv"][None, :, None, None]
    q, k, v = (qkv[:, :qk_dim], qkv[:, qk_dim:2 * qk_dim], qkv[:, 2 * qk_dim:])
    q, k, v = (t.reshape(B, -1, N) for t in (q, k, v))
    attn = jnp.einsum("bci,bcj->bij", q, k) * (qk_dim ** -0.5)
    attn = jax.nn.softmax(attn, axis=-1)
    x1o = jnp.einsum("bcj,bij->bci", v, attn).reshape(B, pdim, H, W)
    y = jnp.maximum(jnp.concatenate([x1o, x2], axis=1), 0.0)
    out = jnp.einsum("oc,bchw->bohw", p["wproj"], y) + p["bproj"][None, :, None, None]
    return out


if __name__ == "__main__":
    dim, qk_dim, pdim = 32, 16, 16
    B, H, W = 2, 8, 8

    key = jax.random.PRNGKey(0)
    k_x, k_p = jax.random.split(key)
    x = jax.random.normal(k_x, (B, dim, H, W), jnp.float32)
    params = init_params(k_p, dim, qk_dim, pdim)
    kparams = prepare_kernel_params(params, dim=dim, qk_dim=qk_dim, pdim=pdim)

    out = shsa_forward(x, kparams)
    out = jax.block_until_ready(out)

    ref = shsa_reference(x, params, pdim=pdim, qk_dim=qk_dim)
    assert out.shape == (B, dim, H, W)
    max_err = float(jnp.max(jnp.abs(out - ref)))
    # Tolerance covers the approximate EUP reciprocal in the softmax.
    assert jnp.allclose(out, ref, atol=5e-3, rtol=5e-3), max_err
    print("KERNEL_OK")
</pallas_src>

<mosaic_0001>
module attributes {stable_mosaic.version = 11 : i64} {
  func.func @shsa_kernel(%arg0: i32, %arg1: memref<2x32x64xf32, #tpu.memory_space<vmem>>, %arg2: memref<16x16xf32, #tpu.memory_space<vmem>>, %arg3: memref<16x1xf32, #tpu.memory_space<vmem>>, %arg4: memref<16x16xf32, #tpu.memory_space<vmem>>, %arg5: memref<16x1xf32, #tpu.memory_space<vmem>>, %arg6: memref<16x16xf32, #tpu.memory_space<vmem>>, %arg7: memref<16x1xf32, #tpu.memory_space<vmem>>, %arg8: memref<32x16xf32, #tpu.memory_space<vmem>>, %arg9: memref<32x16xf32, #tpu.memory_space<vmem>>, %arg10: memref<32x1xf32, #tpu.memory_space<vmem>>, %arg11: memref<2x32x64xf32, #tpu.memory_space<vmem>>) attributes {dimension_semantics = [#tpu.dimension_semantics<arbitrary>], iteration_bounds = array<i64: 1>, scalar_prefetch = 0 : i64, scratch_operands = 0 : i64, tpu.core_type = #tpu.core_type<tc>, window_params = [{pipeline_mode = #tpu.pipeline_mode<synchronous>, transform_indices = @transform_0, window_bounds = array<i64: 2, 32, 64>}, {pipeline_mode = #tpu.pipeline_mode<synchronous>, transform_indices = @transform_1, window_bounds = array<i64: 16, 16>}, {pipeline_mode = #tpu.pipeline_mode<synchronous>, transform_indices = @transform_2, window_bounds = array<i64: 16, 1>}, {pipeline_mode = #tpu.pipeline_mode<synchronous>, transform_indices = @transform_3, window_bounds = array<i64: 16, 16>}, {pipeline_mode = #tpu.pipeline_mode<synchronous>, transform_indices = @transform_4, window_bounds = array<i64: 16, 1>}, {pipeline_mode = #tpu.pipeline_mode<synchronous>, transform_indices = @transform_5, window_bounds = array<i64: 16, 16>}, {pipeline_mode = #tpu.pipeline_mode<synchronous>, transform_indices = @transform_6, window_bounds = array<i64: 16, 1>}, {pipeline_mode = #tpu.pipeline_mode<synchronous>, transform_indices = @transform_7, window_bounds = array<i64: 32, 16>}, {pipeline_mode = #tpu.pipeline_mode<synchronous>, transform_indices = @transform_8, window_bounds = array<i64: 32, 16>}, {pipeline_mode = #tpu.pipeline_mode<synchronous>, transform_indices = @transform_9, window_bounds = array<i64: 32, 1>}, {pipeline_mode = #tpu.pipeline_mode<synchronous>, transform_indices = @transform_10, window_bounds = array<i64: 2, 32, 64>}]} {
    %c0 = arith.constant 0 : index
    %c0_0 = arith.constant 0 : index
    %0 = vector.load %arg2[%c0, %c0_0] : memref<16x16xf32, #tpu.memory_space<vmem>>, vector<16x16xf32>
    %c0_1 = arith.constant 0 : index
    %c0_2 = arith.constant 0 : index
    %1 = vector.load %arg3[%c0_1, %c0_2] : memref<16x1xf32, #tpu.memory_space<vmem>>, vector<16x1xf32>
    %c0_3 = arith.constant 0 : index
    %c0_4 = arith.constant 0 : index
    %2 = vector.load %arg4[%c0_3, %c0_4] : memref<16x16xf32, #tpu.memory_space<vmem>>, vector<16x16xf32>
    %c0_5 = arith.constant 0 : index
    %c0_6 = arith.constant 0 : index
    %3 = vector.load %arg5[%c0_5, %c0_6] : memref<16x1xf32, #tpu.memory_space<vmem>>, vector<16x1xf32>
    %c0_7 = arith.constant 0 : index
    %c0_8 = arith.constant 0 : index
    %4 = vector.load %arg6[%c0_7, %c0_8] : memref<16x16xf32, #tpu.memory_space<vmem>>, vector<16x16xf32>
    %c0_9 = arith.constant 0 : index
    %c0_10 = arith.constant 0 : index
    %5 = vector.load %arg7[%c0_9, %c0_10] : memref<16x1xf32, #tpu.memory_space<vmem>>, vector<16x1xf32>
    %c0_11 = arith.constant 0 : index
    %c0_12 = arith.constant 0 : index
    %6 = vector.load %arg8[%c0_11, %c0_12] : memref<32x16xf32, #tpu.memory_space<vmem>>, vector<32x16xf32>
    %c0_13 = arith.constant 0 : index
    %c0_14 = arith.constant 0 : index
    %7 = vector.load %arg9[%c0_13, %c0_14] : memref<32x16xf32, #tpu.memory_space<vmem>>, vector<32x16xf32>
    %c0_15 = arith.constant 0 : index
    %c0_16 = arith.constant 0 : index
    %8 = vector.load %arg10[%c0_15, %c0_16] : memref<32x1xf32, #tpu.memory_space<vmem>>, vector<32x1xf32>
    %c0_17 = arith.constant 0 : index
    %c0_18 = arith.constant 0 : index
    %c0_19 = arith.constant 0 : index
    %9 = vector.load %arg1[%c0_17, %c0_18, %c0_19] : memref<2x32x64xf32, #tpu.memory_space<vmem>>, vector<1x32x64xf32>
    %10 = vector.shape_cast %9 : vector<1x32x64xf32> to vector<32x64xf32>
    %11 = vector.extract_strided_slice %10 {offsets = [0, 0], sizes = [16, 64], strides = [1, 1]} : vector<32x64xf32> to vector<16x64xf32>
    %12 = vector.extract_strided_slice %10 {offsets = [16, 0], sizes = [16, 64], strides = [1, 1]} : vector<32x64xf32> to vector<16x64xf32>
    %13 = vector.shape_cast %11 : vector<16x64xf32> to vector<1x16x64xf32>
    %cst = arith.constant dense<0.000000e+00> : vector<1xf32>
    %14 = vector.multi_reduction <add>, %13, %cst [1, 2] : vector<1x16x64xf32> to vector<1xf32>
    %15 = vector.shape_cast %14 : vector<1xf32> to vector<1x1x1xf32>
    %16 = vector.extract %15[0, 0, 0] : f32 from vector<1x1x1xf32>
    %17 = arith.mulf %11, %11 : vector<16x64xf32>
    %18 = vector.shape_cast %17 : vector<16x64xf32> to vector<1x16x64xf32>
    %cst_20 = arith.constant dense<0.000000e+00> : vector<1xf32>
    %19 = vector.multi_reduction <add>, %18, %cst_20 [1, 2] : vector<1x16x64xf32> to vector<1xf32>
    %20 = vector.shape_cast %19 : vector<1xf32> to vector<1x1x1xf32>
    %21 = vector.extract %20[0, 0, 0] : f32 from vector<1x1x1xf32>
    %cst_21 = arith.constant 9.765625E-4 : f32
    %22 = arith.mulf %16, %cst_21 : f32
    %cst_22 = arith.constant 9.765625E-4 : f32
    %23 = arith.mulf %21, %cst_22 : f32
    %24 = arith.mulf %22, %22 : f32
    %25 = arith.subf %23, %24 : f32
    %26 = vector.broadcast %22 : f32 to vector<16x64xf32>
    %27 = arith.subf %11, %26 : vector<16x64xf32>
    %cst_23 = arith.constant 9.99999974E-6 : f32
    %28 = arith.addf %25, %cst_23 : f32
    %29 = math.rsqrt %28 : f32
    %30 = vector.broadcast %29 : f32 to vector<16x64xf32>
    %31 = arith.mulf %27, %30 : vector<16x64xf32>
    %cst_24 = arith.constant dense<0.000000e+00> : vector<16x64xf32>
    %32 = tpu.matmul %0, %31, %cst_24 {dimension_numbers = #tpu.dot_dimension_numbers<[1], [0], [0], [1], [0, 0, 1, 1], [], []>} : vector<16x16xf32>, vector<16x64xf32>, vector<16x64xf32> -> vector<16x64xf32>
    %33 = vector.broadcast %1 : vector<16x1xf32> to vector<16x64xf32>
    %34 = arith.addf %32, %33 : vector<16x64xf32>
    %cst_25 = arith.constant dense<0.000000e+00> : vector<16x64xf32>
    %35 = tpu.matmul %2, %31, %cst_25 {dimension_numbers = #tpu.dot_dimension_numbers<[1], [0], [0], [1], [0, 0, 1, 1], [], []>} : vector<16x16xf32>, vector<16x64xf32>, vector<16x64xf32> -> vector<16x64xf32>
    %36 = vector.broadcast %3 : vector<16x1xf32> to vector<16x64xf32>
    %37 = arith.addf %35, %36 : vector<16x64xf32>
    %cst_26 = arith.constant dense<0.000000e+00> : vector<16x64xf32>
    %38 = tpu.matmul %4, %31, %cst_26 {dimension_numbers = #tpu.dot_dimension_numbers<[1], [0], [0], [1], [0, 0, 1, 1], [], []>} : vector<16x16xf32>, vector<16x64xf32>, vector<16x64xf32> -> vector<16x64xf32>
    %39 = vector.broadcast %5 : vector<16x1xf32> to vector<16x64xf32>
    %40 = arith.addf %38, %39 : vector<16x64xf32>
    %41 = tpu.transpose %34, [1, 0] : vector<16x64xf32> -> vector<64x16xf32>
    %cst_27 = arith.constant dense<0.000000e+00> : vector<64x64xf32>
    %42 = tpu.matmul %41, %37, %cst_27 {dimension_numbers = #tpu.dot_dimension_numbers<[1], [0], [0], [1], [0, 0, 1, 1], [], []>} : vector<64x16xf32>, vector<16x64xf32>, vector<64x64xf32> -> vector<64x64xf32>
    %cst_28 = arith.constant dense<0xFF800000> : vector<64xf32>
    %43 = vector.multi_reduction <maximumf>, %42, %cst_28 [1] : vector<64x64xf32> to vector<64xf32>
    %44 = vector.shape_cast %43 : vector<64xf32> to vector<64x1xf32>
    %45 = vector.broadcast %44 : vector<64x1xf32> to vector<64x64xf32>
    %46 = arith.subf %42, %45 : vector<64x64xf32>
    %47 = math.exp %46 : vector<64x64xf32>
    %cst_29 = arith.constant dense<0.000000e+00> : vector<64xf32>
    %48 = vector.multi_reduction <add>, %47, %cst_29 [1] : vector<64x64xf32> to vector<64xf32>
    %49 = vector.shape_cast %48 : vector<64xf32> to vector<64x1xf32>
    %50 = tpu.reciprocal %49 {approx = true} : vector<64x1xf32> -> vector<64x1xf32>
    %51 = vector.broadcast %50 : vector<64x1xf32> to vector<64x64xf32>
    %52 = arith.mulf %47, %51 : vector<64x64xf32>
    %cst_30 = arith.constant dense<0.000000e+00> : vector<16x64xf32>
    %53 = tpu.matmul %40, %52, %cst_30 {dimension_numbers = #tpu.dot_dimension_numbers<[1], [1], [0], [0], [0, 0, 1, 0], [], []>} : vector<16x64xf32>, vector<64x64xf32>, vector<16x64xf32> -> vector<16x64xf32>
    %cst_31 = arith.constant 0.000000e+00 : f32
    %54 = vector.broadcast %cst_31 : f32 to vector<16x64xf32>
    %55 = arith.maximumf %53, %54 : vector<16x64xf32>
    %cst_32 = arith.constant dense<0.000000e+00> : vector<32x64xf32>
    %56 = tpu.matmul %6, %55, %cst_32 {dimension_numbers = #tpu.dot_dimension_numbers<[1], [0], [0], [1], [0, 0, 1, 1], [], []>} : vector<32x16xf32>, vector<16x64xf32>, vector<32x64xf32> -> vector<32x64xf32>
    %cst_33 = arith.constant 0.000000e+00 : f32
    %57 = vector.broadcast %cst_33 : f32 to vector<16x64xf32>
    %58 = arith.maximumf %12, %57 : vector<16x64xf32>
    %cst_34 = arith.constant dense<0.000000e+00> : vector<32x64xf32>
    %59 = tpu.matmul %7, %58, %cst_34 {dimension_numbers = #tpu.dot_dimension_numbers<[1], [0], [0], [1], [0, 0, 1, 1], [], []>} : vector<32x16xf32>, vector<16x64xf32>, vector<32x64xf32> -> vector<32x64xf32>
    %60 = arith.addf %56, %59 : vector<32x64xf32>
    %61 = vector.broadcast %8 : vector<32x1xf32> to vector<32x64xf32>
    %62 = arith.addf %60, %61 : vector<32x64xf32>
    %c0_35 = arith.constant 0 : index
    %c0_36 = arith.constant 0 : index
    %c0_37 = arith.constant 0 : index
    %63 = vector.load %arg11[%c0_35, %c0_36, %c0_37] : memref<2x32x64xf32, #tpu.memory_space<vmem>>, vector<1x32x64xf32>
    %64 = vector.shape_cast %63 : vector<1x32x64xf32> to vector<32x64xf32>
    %65 = vector.shape_cast %62 : vector<32x64xf32> to vector<1x32x64xf32>
    tpu.vector_store %arg11[%c0_35, %c0_36, %c0_37], %65 {strides = array<i32>} : memref<2x32x64xf32, #tpu.memory_space<vmem>>, vector<1x32x64xf32>,
    %c1 = arith.constant 1 : index
    %c0_38 = arith.constant 0 : index
    %c0_39 = arith.constant 0 : index
    %66 = vector.load %arg1[%c1, %c0_38, %c0_39] : memref<2x32x64xf32, #tpu.memory_space<vmem>>, vector<1x32x64xf32>
    %67 = vector.shape_cast %66 : vector<1x32x64xf32> to vector<32x64xf32>
    %68 = vector.extract_strided_slice %67 {offsets = [0, 0], sizes = [16, 64], strides = [1, 1]} : vector<32x64xf32> to vector<16x64xf32>
    %69 = vector.extract_strided_slice %67 {offsets = [16, 0], sizes = [16, 64], strides = [1, 1]} : vector<32x64xf32> to vector<16x64xf32>
    %70 = vector.shape_cast %68 : vector<16x64xf32> to vector<1x16x64xf32>
    %cst_40 = arith.constant dense<0.000000e+00> : vector<1xf32>
    %71 = vector.multi_reduction <add>, %70, %cst_40 [1, 2] : vector<1x16x64xf32> to vector<1xf32>
    %72 = vector.shape_cast %71 : vector<1xf32> to vector<1x1x1xf32>
    %73 = vector.extract %72[0, 0, 0] : f32 from vector<1x1x1xf32>
    %74 = arith.mulf %68, %68 : vector<16x64xf32>
    %75 = vector.shape_cast %74 : vector<16x64xf32> to vector<1x16x64xf32>
    %cst_41 = arith.constant dense<0.000000e+00> : vector<1xf32>
    %76 = vector.multi_reduction <add>, %75, %cst_41 [1, 2] : vector<1x16x64xf32> to vector<1xf32>
    %77 = vector.shape_cast %76 : vector<1xf32> to vector<1x1x1xf32>
    %78 = vector.extract %77[0, 0, 0] : f32 from vector<1x1x1xf32>
    %cst_42 = arith.constant 9.765625E-4 : f32
    %79 = arith.mulf %73, %cst_42 : f32
    %cst_43 = arith.constant 9.765625E-4 : f32
    %80 = arith.mulf %78, %cst_43 : f32
    %81 = arith.mulf %79, %79 : f32
    %82 = arith.subf %80, %81 : f32
    %83 = vector.broadcast %79 : f32 to vector<16x64xf32>
    %84 = arith.subf %68, %83 : vector<16x64xf32>
    %cst_44 = arith.constant 9.99999974E-6 : f32
    %85 = arith.addf %82, %cst_44 : f32
    %86 = math.rsqrt %85 : f32
    %87 = vector.broadcast %86 : f32 to vector<16x64xf32>
    %88 = arith.mulf %84, %87 : vector<16x64xf32>
    %cst_45 = arith.constant dense<0.000000e+00> : vector<16x64xf32>
    %89 = tpu.matmul %0, %88, %cst_45 {dimension_numbers = #tpu.dot_dimension_numbers<[1], [0], [0], [1], [0, 0, 1, 1], [], []>} : vector<16x16xf32>, vector<16x64xf32>, vector<16x64xf32> -> vector<16x64xf32>
    %90 = vector.broadcast %1 : vector<16x1xf32> to vector<16x64xf32>
    %91 = arith.addf %89, %90 : vector<16x64xf32>
    %cst_46 = arith.constant dense<0.000000e+00> : vector<16x64xf32>
    %92 = tpu.matmul %2, %88, %cst_46 {dimension_numbers = #tpu.dot_dimension_numbers<[1], [0], [0], [1], [0, 0, 1, 1], [], []>} : vector<16x16xf32>, vector<16x64xf32>, vector<16x64xf32> -> vector<16x64xf32>
    %93 = vector.broadcast %3 : vector<16x1xf32> to vector<16x64xf32>
    %94 = arith.addf %92, %93 : vector<16x64xf32>
    %cst_47 = arith.constant dense<0.000000e+00> : vector<16x64xf32>
    %95 = tpu.matmul %4, %88, %cst_47 {dimension_numbers = #tpu.dot_dimension_numbers<[1], [0], [0], [1], [0, 0, 1, 1], [], []>} : vector<16x16xf32>, vector<16x64xf32>, vector<16x64xf32> -> vector<16x64xf32>
    %96 = vector.broadcast %5 : vector<16x1xf32> to vector<16x64xf32>
    %97 = arith.addf %95, %96 : vector<16x64xf32>
    %98 = tpu.transpose %91, [1, 0] : vector<16x64xf32> -> vector<64x16xf32>
    %cst_48 = arith.constant dense<0.000000e+00> : vector<64x64xf32>
    %99 = tpu.matmul %98, %94, %cst_48 {dimension_numbers = #tpu.dot_dimension_numbers<[1], [0], [0], [1], [0, 0, 1, 1], [], []>} : vector<64x16xf32>, vector<16x64xf32>, vector<64x64xf32> -> vector<64x64xf32>
    %cst_49 = arith.constant dense<0xFF800000> : vector<64xf32>
    %100 = vector.multi_reduction <maximumf>, %99, %cst_49 [1] : vector<64x64xf32> to vector<64xf32>
    %101 = vector.shape_cast %100 : vector<64xf32> to vector<64x1xf32>
    %102 = vector.broadcast %101 : vector<64x1xf32> to vector<64x64xf32>
    %103 = arith.subf %99, %102 : vector<64x64xf32>
    %104 = math.exp %103 : vector<64x64xf32>
    %cst_50 = arith.constant dense<0.000000e+00> : vector<64xf32>
    %105 = vector.multi_reduction <add>, %104, %cst_50 [1] : vector<64x64xf32> to vector<64xf32>
    %106 = vector.shape_cast %105 : vector<64xf32> to vector<64x1xf32>
    %107 = tpu.reciprocal %106 {approx = true} : vector<64x1xf32> -> vector<64x1xf32>
    %108 = vector.broadcast %107 : vector<64x1xf32> to vector<64x64xf32>
    %109 = arith.mulf %104, %108 : vector<64x64xf32>
    %cst_51 = arith.constant dense<0.000000e+00> : vector<16x64xf32>
    %110 = tpu.matmul %97, %109, %cst_51 {dimension_numbers = #tpu.dot_dimension_numbers<[1], [1], [0], [0], [0, 0, 1, 0], [], []>} : vector<16x64xf32>, vector<64x64xf32>, vector<16x64xf32> -> vector<16x64xf32>
    %cst_52 = arith.constant 0.000000e+00 : f32
    %111 = vector.broadcast %cst_52 : f32 to vector<16x64xf32>
    %112 = arith.maximumf %110, %111 : vector<16x64xf32>
    %cst_53 = arith.constant dense<0.000000e+00> : vector<32x64xf32>
    %113 = tpu.matmul %6, %112, %cst_53 {dimension_numbers = #tpu.dot_dimension_numbers<[1], [0], [0], [1], [0, 0, 1, 1], [], []>} : vector<32x16xf32>, vector<16x64xf32>, vector<32x64xf32> -> vector<32x64xf32>
    %cst_54 = arith.constant 0.000000e+00 : f32
    %114 = vector.broadcast %cst_54 : f32 to vector<16x64xf32>
    %115 = arith.maximumf %69, %114 : vector<16x64xf32>
    %cst_55 = arith.constant dense<0.000000e+00> : vector<32x64xf32>
    %116 = tpu.matmul %7, %115, %cst_55 {dimension_numbers = #tpu.dot_dimension_numbers<[1], [0], [0], [1], [0, 0, 1, 1], [], []>} : vector<32x16xf32>, vector<16x64xf32>, vector<32x64xf32> -> vector<32x64xf32>
    %117 = arith.addf %113, %116 : vector<32x64xf32>
    %118 = vector.broadcast %8 : vector<32x1xf32> to vector<32x64xf32>
    %119 = arith.addf %117, %118 : vector<32x64xf32>
    %c1_56 = arith.constant 1 : index
    %c0_57 = arith.constant 0 : index
    %c0_58 = arith.constant 0 : index
    %120 = vector.load %arg11[%c1_56, %c0_57, %c0_58] : memref<2x32x64xf32, #tpu.memory_space<vmem>>, vector<1x32x64xf32>
    %121 = vector.shape_cast %120 : vector<1x32x64xf32> to vector<32x64xf32>
    %122 = vector.shape_cast %119 : vector<32x64xf32> to vector<1x32x64xf32>
    tpu.vector_store %arg11[%c1_56, %c0_57, %c0_58], %122 {strides = array<i32>} : memref<2x32x64xf32, #tpu.memory_space<vmem>>, vector<1x32x64xf32>,
    return
  }
  func.func @transform_0(%arg0: i32) -> (i32, i32, i32) {
    %c0_i32 = arith.constant 0 : i32
    %c0_i32_0 = arith.constant 0 : i32
    %c0_i32_1 = arith.constant 0 : i32
    %c0_i32_2 = arith.constant 0 : i32
    return %c0_i32, %c0_i32_0, %c0_i32_1 : i32, i32, i32
  }
  func.func @transform_1(%arg0: i32) -> (i32, i32) {
    %c0_i32 = arith.constant 0 : i32
    %c0_i32_0 = arith.constant 0 : i32
    %c0_i32_1 = arith.constant 0 : i32
    return %c0_i32, %c0_i32_0 : i32, i32
  }
  func.func @transform_2(%arg0: i32) -> (i32, i32) {
    %c0_i32 = arith.constant 0 : i32
    %c0_i32_0 = arith.constant 0 : i32
    %c0_i32_1 = arith.constant 0 : i32
    return %c0_i32, %c0_i32_0 : i32, i32
  }
  func.func @transform_3(%arg0: i32) -> (i32, i32) {
    %c0_i32 = arith.constant 0 : i32
    %c0_i32_0 = arith.constant 0 : i32
    %c0_i32_1 = arith.constant 0 : i32
    return %c0_i32, %c0_i32_0 : i32, i32
  }
  func.func @transform_4(%arg0: i32) -> (i32, i32) {
    %c0_i32 = arith.constant 0 : i32
    %c0_i32_0 = arith.constant 0 : i32
    %c0_i32_1 = arith.constant 0 : i32
    return %c0_i32, %c0_i32_0 : i32, i32
  }
  func.func @transform_5(%arg0: i32) -> (i32, i32) {
    %c0_i32 = arith.constant 0 : i32
    %c0_i32_0 = arith.constant 0 : i32
    %c0_i32_1 = arith.constant 0 : i32
    return %c0_i32, %c0_i32_0 : i32, i32
  }
  func.func @transform_6(%arg0: i32) -> (i32, i32) {
    %c0_i32 = arith.constant 0 : i32
    %c0_i32_0 = arith.constant 0 : i32
    %c0_i32_1 = arith.constant 0 : i32
    return %c0_i32, %c0_i32_0 : i32, i32
  }
  func.func @transform_7(%arg0: i32) -> (i32, i32) {
    %c0_i32 = arith.constant 0 : i32
    %c0_i32_0 = arith.constant 0 : i32
    %c0_i32_1 = arith.constant 0 : i32
    return %c0_i32, %c0_i32_0 : i32, i32
  }
  func.func @transform_8(%arg0: i32) -> (i32, i32) {
    %c0_i32 = arith.constant 0 : i32
    %c0_i32_0 = arith.constant 0 : i32
    %c0_i32_1 = arith.constant 0 : i32
    return %c0_i32, %c0_i32_0 : i32, i32
  }
  func.func @transform_9(%arg0: i32) -> (i32, i32) {
    %c0_i32 = arith.constant 0 : i32
    %c0_i32_0 = arith.constant 0 : i32
    %c0_i32_1 = arith.constant 0 : i32
    return %c0_i32, %c0_i32_0 : i32, i32
  }
  func.func @transform_10(%arg0: i32) -> (i32, i32, i32) {
    %c0_i32 = arith.constant 0 : i32
    %c0_i32_0 = arith.constant 0 : i32
    %c0_i32_1 = arith.constant 0 : i32
    %c0_i32_2 = arith.constant 0 : i32
    return %c0_i32, %c0_i32_0, %c0_i32_1 : i32, i32, i32
  }
}

</mosaic_0001>

<llo_original>
// kernel: tpu_custom_call.1
$region0: #{tpu_custom_call.1}
  #allocation0 [shape = 'u32[]', space=smem, size = 0x4, offset = 0x4, fixed_abs, tag = 'smem constant byte address 0x4 - core index']
  #allocation1 [shape = 'u32[144,128]{1,0:T(1,128)}', space=vmem, size = 0x12000, scoped, tag = 'internal scratch']
  %s0 = inlined_call_operand.vmem [shape: f32[2,32,64], index: 0, kind: input, shape index: {}]
  %s1 = inlined_call_operand.vmem [shape: f32[16,16], index: 1, kind: input, shape index: {}]
  %s2 = inlined_call_operand.vmem [shape: f32[16,1], index: 2, kind: input, shape index: {}]
  %s3 = inlined_call_operand.vmem [shape: f32[16,16], index: 3, kind: input, shape index: {}]
  %s4 = inlined_call_operand.vmem [shape: f32[16,1], index: 4, kind: input, shape index: {}]
  %s5 = inlined_call_operand.vmem [shape: f32[16,16], index: 5, kind: input, shape index: {}]
  %s6 = inlined_call_operand.vmem [shape: f32[16,1], index: 6, kind: input, shape index: {}]
  %s7 = inlined_call_operand.vmem [shape: f32[32,16], index: 7, kind: input, shape index: {}]
  %s8 = inlined_call_operand.vmem [shape: f32[32,16], index: 8, kind: input, shape index: {}]
  %s9 = inlined_call_operand.vmem [shape: f32[32,1], index: 9, kind: input, shape index: {}]
  %s10 = inlined_call_operand.hbm [shape: f32[2,32,64], index: 10, kind: output, shape index: {}]
  %s11 = sld [smem:[#allocation0]]
  $region50: #{tpu_custom_call.1} parent=0
    _
  %s13 = ssub.s32 1, %s11
  %s14 = scalar_select 0, %s13, %s11
  $region1: #{tpu_custom_call.1} parent=0
    #allocation2 [shape = 'u8[32768]{0}', space=vmem, size = 0x8000, scoped, tag = 'output window, operand 0, single buffered']
    #allocation3 [shape = 's32[1]{0}', space=sflag, size = 0x4, scoped, tag = 'scoped memory for tpu_custom_call.1']
    %15 = vsyncpa [#allocation3], 0
    // Predicated region
    $region2: #{tpu_custom_call.1} parent=1 // pred_check
      _
    $region3: #{tpu_custom_call.1} parent=1 // pred_check_branch
      %17 = sbr.rel (0) target = $region5
    $region4: #{tpu_custom_call.1} parent=1 // pred_region
      _
    $region5: #{tpu_custom_call.1} parent=1 // pred_fallthru
      _
    // Predicated region
    $region6: #{tpu_custom_call.1} parent=1 // pred_check
      _
    $region7: #{tpu_custom_call.1} parent=1 // pred_check_branch
      %19 = sbr.rel (0) target = $region9
    $region8: #{tpu_custom_call.1} parent=1 // pred_region
      _
    $region9: #{tpu_custom_call.1} parent=1 // pred_fallthru
      _
    // Predicated region
    $region10: #{tpu_custom_call.1} parent=1 // pred_check
      _
    $region11: #{tpu_custom_call.1} parent=1 // pred_check_branch
      %21 = sbr.rel (0) target = $region13
    $region12: #{tpu_custom_call.1} parent=1 // pred_region
      _
    $region13: #{tpu_custom_call.1} parent=1 // pred_fallthru
      _
    // Predicated region
    $region14: #{tpu_custom_call.1} parent=1 // pred_check
      _
    $region15: #{tpu_custom_call.1} parent=1 // pred_check_branch
      %23 = sbr.rel (0) target = $region17
    $region16: #{tpu_custom_call.1} parent=1 // pred_region
      _
    $region17: #{tpu_custom_call.1} parent=1 // pred_fallthru
      _
    // Predicated region
    $region18: #{tpu_custom_call.1} parent=1 // pred_check
      _
    $region19: #{tpu_custom_call.1} parent=1 // pred_check_branch
      %25 = sbr.rel (0) target = $region21
    $region20: #{tpu_custom_call.1} parent=1 // pred_region
      _
    $region21: #{tpu_custom_call.1} parent=1 // pred_fallthru
      _
    // Predicated region
    $region22: #{tpu_custom_call.1} parent=1 // pred_check
      _
    $region23: #{tpu_custom_call.1} parent=1 // pred_check_branch
      %27 = sbr.rel (0) target = $region25
    $region24: #{tpu_custom_call.1} parent=1 // pred_region
      _
    $region25: #{tpu_custom_call.1} parent=1 // pred_fallthru
      _
    // Predicated region
    $region26: #{tpu_custom_call.1} parent=1 // pred_check
      _
    $region27: #{tpu_custom_call.1} parent=1 // pred_check_branch
      %29 = sbr.rel (0) target = $region29
    $region28: #{tpu_custom_call.1} parent=1 // pred_region
      _
    $region29: #{tpu_custom_call.1} parent=1 // pred_fallthru
      _
    // Predicated region
    $region30: #{tpu_custom_call.1} parent=1 // pred_check
      _
    $region31: #{tpu_custom_call.1} parent=1 // pred_check_branch
      %31 = sbr.rel (0) target = $region33
    $region32: #{tpu_custom_call.1} parent=1 // pred_region
      _
    $region33: #{tpu_custom_call.1} parent=1 // pred_fallthru
      _
    // Predicated region
    $region34: #{tpu_custom_call.1} parent=1 // pred_check
      _
    $region35: #{tpu_custom_call.1} parent=1 // pred_check_branch
      %33 = sbr.rel (0) target = $region37
    $region36: #{tpu_custom_call.1} parent=1 // pred_region
      _
    $region37: #{tpu_custom_call.1} parent=1 // pred_fallthru
      _
    // Predicated region
    $region38: #{tpu_custom_call.1} parent=1 // pred_check
      _
    $region39: #{tpu_custom_call.1} parent=1 // pred_check_branch
      %35 = sbr.rel (0) target = $region41
    $region40: #{tpu_custom_call.1} parent=1 // pred_region
      _
    $region41: #{tpu_custom_call.1} parent=1 // pred_fallthru
      _
    %v36 = vld [vmem:[%s1] sm:$0xff]
    %v37 = vld [vmem:[%s1 + $0x8] sm:$0xff]
    %v38 = vld [vmem:[%s2] sm:$0xff]
    %v39 = vld [vmem:[%s2 + $0x8] sm:$0xff]
    %v40 = vld [vmem:[%s3] sm:$0xff]
    %v41 = vld [vmem:[%s3 + $0x8] sm:$0xff]
    %v42 = vld [vmem:[%s4] sm:$0xff]
    %v43 = vld [vmem:[%s4 + $0x8] sm:$0xff]
    %v44 = vld [vmem:[%s5] sm:$0xff]
    %v45 = vld [vmem:[%s5 + $0x8] sm:$0xff]
    %v46 = vld [vmem:[%s6] sm:$0xff]
    %v47 = vld [vmem:[%s6 + $0x8] sm:$0xff]
    %v48 = vld [vmem:[%s7] sm:$0xff]
    %v49 = vld [vmem:[%s7 + $0x8] sm:$0xff]
    %v50 = vld [vmem:[%s7 + $0x10] sm:$0xff]
    %v51 = vld [vmem:[%s7 + $0x18] sm:$0xff]
    %v52 = vld [vmem:[%s8] sm:$0xff]
    %v53 = vld [vmem:[%s8 + $0x8] sm:$0xff]
    %v54 = vld [vmem:[%s8 + $0x10] sm:$0xff]
    %v55 = vld [vmem:[%s8 + $0x18] sm:$0xff]
    %v56 = vld [vmem:[%s9] sm:$0xff]
    %v57 = vld [vmem:[%s9 + $0x8] sm:$0xff]
    %v58 = vld [vmem:[%s9 + $0x10] sm:$0xff]
    %v59 = vld [vmem:[%s9 + $0x18] sm:$0xff]
    %v60 = vld [vmem:[%s0] sm:$0xff]
    %v61 = vld [vmem:[%s0 + $0x8] sm:$0xff]
    %v62 = vld [vmem:[%s0 + $0x10] sm:$0xff]
    %v63 = vld [vmem:[%s0 + $0x18] sm:$0xff]
    %vm64 = vcmask 523264
    %v65 = vsel %vm64, %v60, 0.0
    %v66 = vsel %vm64, %v61, 0.0
    %v67 = vadd.f32 %v65, %v66
    %68 = vadd.xlane.f32.xlu0 %v67
    %v69 = vpop.xlane.xlu0 %68
    %v70 = vrot.slane %v69, 4
    %v71 = vadd.f32 %v69, %v70
    %v72 = vrot.slane %v71, 2
    %v73 = vadd.f32 %v71, %v72
    %v74 = vrot.slane %v73, 1
    %v75 = vadd.f32 %v73, %v74
    %s76 = vtos %v75
    %v77 = vmul.f32 %v60, %v60
    %v78 = vmul.f32 %v61, %v61
    %v79 = vsel %vm64, %v77, 0.0
    %v80 = vsel %vm64, %v78, 0.0
    %v81 = vadd.f32 %v79, %v80
    %82 = vadd.xlane.f32.xlu0 %v81
    %v83 = vpop.xlane.xlu0 %82
    %v84 = vrot.slane %v83, 4
    %v85 = vadd.f32 %v83, %v84
    %v86 = vrot.slane %v85, 2
    %v87 = vadd.f32 %v85, %v86
    %v88 = vrot.slane %v87, 1
    %v89 = vadd.f32 %v87, %v88
    %s90 = vtos %v89
    %s91 = smul.f32 %s76, 0.0009765625
    %s92 = smul.f32 %s90, 0.0009765625
    %s93 = smul.f32 %s91, %s91
    %s94 = ssub.f32 %s92, %s93
    %v95 = vstv %s91
    %v96 = vsub.f32 %v60, %v95
    %v97 = vsub.f32 %v61, %v95
    %s98 = sadd.f32 %s94, 1e-05
    %v99 = vstv %s98
    %v100 = vrsqrt.pop %v99
    %s101 = vtos %v100
    %v102 = vstv %s101
    %v103 = vmul.f32 %v96, %v102
    %v104 = vmul.f32 %v97, %v102
    %106 = vset.pattern.permute.xlu0 0
    %107 = vperm.xlu0 %106, %v38
    %v108 = vpop.permute.xlu0 %107
    %111 = vset.pattern.permute.xlu0 0
    %112 = vperm.xlu0 %111, %v39
    %v113 = vpop.permute.xlu0 %112
    %vm115 = vcmask 130048
    %v117 = vsel %vm115, %v36, 0
    %v120 = vsel %vm115, %v37, 0
    %122 = vmatprep.subr.mxu0 0.0
    %123 = vmatpush1.msra.mxu0 %v103
    %124 = vmatprep.subr.mxu0 0.0
    %125 = vmatpush1.msra.mxu0 %v104
    %126 = vmatprep.subr.mxu0 0.0
    %127 = vmatpush1.msra.mxu0 0.0
    %128 = vmatprep.subr.mxu0 0.0
    %129 = vmatpush1.msra.mxu0 0.0
    %130 = vmatprep.subr.mxu0 0.0
    %131 = vmatpush1.msra.mxu0 0.0
    %132 = vmatprep.subr.mxu0 0.0
    %133 = vmatpush1.msra.mxu0 0.0
    %134 = vmatprep.subr.mxu0 0.0
    %135 = vmatpush1.msra.mxu0 0.0
    %136 = vmatprep.subr.mxu0 0.0
    %137 = vmatpush1.msra.mxu0 0.0
    %138 = vmatprep.subr.mxu0 0.0
    %139 = vmatpush1.msra.mxu0 0.0
    %140 = vmatprep.subr.mxu0 0.0
    %141 = vmatpush1.msra.mxu0 0.0
    %142 = vmatprep.subr.mxu0 0.0
    %143 = vmatpush1.msra.mxu0 0.0
    %144 = vmatprep.subr.mxu0 0.0
    %145 = vmatpush1.msra.mxu0 0.0
    %146 = vmatprep.subr.mxu0 0.0
    %147 = vmatpush1.msra.mxu0 0.0
    %148 = vmatprep.subr.mxu0 0.0
    %149 = vmatpush1.msra.mxu0 0.0
    %150 = vmatprep.subr.mxu0 0.0
    %151 = vmatpush1.msra.mxu0 0.0
    %152 = vmatprep.subr.mxu0 0.0
    %153 = vmatpush1.msra.mxu0 0.0
    %154 = vmatprep.subr.mxu0 0.0
    %155 = vmatpush1.msra.mxu0 0.0
    %156 = vmatprep.subr.mxu0 0.0
    %157 = vmatpush1.msra.mxu0 0.0
    %158 = vmatprep.subr.mxu0 0.0
    %159 = vmatpush1.msra.mxu0 0.0
    %160 = vmatprep.subr.mxu0 0.0
    %161 = vmatpush1.msra.mxu0 0.0
    %162 = vmatprep.subr.mxu0 0.0
    %163 = vmatpush1.msra.mxu0 0.0
    %164 = vmatprep.subr.mxu0 0.0
    %165 = vmatpush1.msra.mxu0 0.0
    %166 = vmatprep.subr.mxu0 0.0
    %167 = vmatpush1.msra.mxu0 0.0
    %168 = vmatprep.subr.mxu0 0.0
    %169 = vmatpush1.msra.mxu0 0.0
    %170 = vmatprep.subr.mxu0 0.0
    %171 = vmatpush1.msra.mxu0 0.0
    %172 = vmatprep.subr.mxu0 0.0
    %173 = vmatpush1.msra.mxu0 0.0
    %174 = vmatprep.subr.mxu0 0.0
    %175 = vmatpush1.msra.mxu0 0.0
    %176 = vmatprep.subr.mxu0 0.0
    %177 = vmatpush1.msra.mxu0 0.0
    %178 = vmatprep.subr.mxu0 0.0
    %179 = vmatpush1.msra.mxu0 0.0
    %180 = vmatprep.subr.mxu0 0.0
    %181 = vmatpush1.msra.mxu0 0.0
    %182 = vmatprep.subr.mxu0 0.0
    %183 = vmatpush1.msra.mxu0 0.0
    %184 = vmatprep.subr.mxu0 0.0
    %185 = vmatpush1.msra.mxu0 0.0
    %186 = vmatprep.mubr.f32.mxu0 0.0
    %187 = vmatmul.mubr.f32.gmra.mrb[0].mxu0 %v117
    %v188 = vpop.f32.mrb[0].mxu0
    %v189 = vadd.f32 %v108, %v188
    %v190 = vpop.f32.mrb[0].mxu0
    %191 = vmatprep.mubr.f32.mxu0 0.0
    %192 = vmatmul.mubr.f32.gmra.mrb[0].mxu0 %v120
    %v193 = vpop.f32.mrb[0].mxu0
    %v194 = vadd.f32 %v113, %v193
    %v195 = vpop.f32.mrb[0].mxu0
    %196 = vdwg.mxu0
    %198 = vset.pattern.permute.xlu0 0
    %199 = vperm.xlu0 %198, %v42
    %v200 = vpop.permute.xlu0 %199
    %203 = vset.pattern.permute.xlu0 0
    %204 = vperm.xlu0 %203, %v43
    %v205 = vpop.permute.xlu0 %204
    %v208 = vsel %vm115, %v40, 0
    %v211 = vsel %vm115, %v41, 0
    %213 = vmatprep.subr.mxu0 0.0
    %214 = vmatpush1.msra.mxu0 %v103
    %215 = vmatprep.subr.mxu0 0.0
    %216 = vmatpush1.msra.mxu0 %v104
    %217 = vmatprep.subr.mxu0 0.0
    %218 = vmatpush1.msra.mxu0 0.0
    %219 = vmatprep.subr.mxu0 0.0
    %220 = vmatpush1.msra.mxu0 0.0
    %221 = vmatprep.subr.mxu0 0.0
    %222 = vmatpush1.msra.mxu0 0.0
    %223 = vmatprep.subr.mxu0 0.0
    %224 = vmatpush1.msra.mxu0 0.0
    %225 = vmatprep.subr.mxu0 0.0
    %226 = vmatpush1.msra.mxu0 0.0
    %227 = vmatprep.subr.mxu0 0.0
    %228 = vmatpush1.msra.mxu0 0.0
    %229 = vmatprep.subr.mxu0 0.0
    %230 = vmatpush1.msra.mxu0 0.0
    %231 = vmatprep.subr.mxu0 0.0
    %232 = vmatpush1.msra.mxu0 0.0
    %233 = vmatprep.subr.mxu0 0.0
    %234 = vmatpush1.msra.mxu0 0.0
    %235 = vmatprep.subr.mxu0 0.0
    %236 = vmatpush1.msra.mxu0 0.0
    %237 = vmatprep.subr.mxu0 0.0
    %238 = vmatpush1.msra.mxu0 0.0
    %239 = vmatprep.subr.mxu0 0.0
    %240 = vmatpush1.msra.mxu0 0.0
    %241 = vmatprep.subr.mxu0 0.0
    %242 = vmatpush1.msra.mxu0 0.0
    %243 = vmatprep.subr.mxu0 0.0
    %244 = vmatpush1.msra.mxu0 0.0
    %245 = vmatprep.subr.mxu0 0.0
    %246 = vmatpush1.msra.mxu0 0.0
    %247 = vmatprep.subr.mxu0 0.0
    %248 = vmatpush1.msra.mxu0 0.0
    %249 = vmatprep.subr.mxu0 0.0
    %250 = vmatpush1.msra.mxu0 0.0
    %251 = vmatprep.subr.mxu0 0.0
    %252 = vmatpush1.msra.mxu0 0.0
    %253 = vmatprep.subr.mxu0 0.0
    %254 = vmatpush1.msra.mxu0 0.0
    %255 = vmatprep.subr.mxu0 0.0
    %256 = vmatpush1.msra.mxu0 0.0
    %257 = vmatprep.subr.mxu0 0.0
    %258 = vmatpush1.msra.mxu0 0.0
    %259 = vmatprep.subr.mxu0 0.0
    %260 = vmatpush1.msra.mxu0 0.0
    %261 = vmatprep.subr.mxu0 0.0
    %262 = vmatpush1.msra.mxu0 0.0
    %263 = vmatprep.subr.mxu0 0.0
    %264 = vmatpush1.msra.mxu0 0.0
    %265 = vmatprep.subr.mxu0 0.0
    %266 = vmatpush1.msra.mxu0 0.0
    %267 = vmatprep.subr.mxu0 0.0
    %268 = vmatpush1.msra.mxu0 0.0
    %269 = vmatprep.subr.mxu0 0.0
    %270 = vmatpush1.msra.mxu0 0.0
    %271 = vmatprep.subr.mxu0 0.0
    %272 = vmatpush1.msra.mxu0 0.0
    %273 = vmatprep.subr.mxu0 0.0
    %274 = vmatpush1.msra.mxu0 0.0
    %275 = vmatprep.subr.mxu0 0.0
    %276 = vmatpush1.msra.mxu0 0.0
    %277 = vmatprep.mubr.f32.mxu0 0.0
    %278 = vmatmul.mubr.f32.gmra.mrb[0].mxu0 %v208
    %v279 = vpop.f32.mrb[0].mxu0
    %v280 = vadd.f32 %v200, %v279
    %v281 = vpop.f32.mrb[0].mxu0
    %282 = vmatprep.mubr.f32.mxu0 0.0
    %283 = vmatmul.mubr.f32.gmra.mrb[0].mxu0 %v211
    %v284 = vpop.f32.mrb[0].mxu0
    %v285 = vadd.f32 %v205, %v284
    %v286 = vpop.f32.mrb[0].mxu0
    %287 = vdwg.mxu0
    %289 = vset.pattern.permute.xlu0 0
    %290 = vperm.xlu0 %289, %v46
    %v291 = vpop.permute.xlu0 %290
    %294 = vset.pattern.permute.xlu0 0
    %295 = vperm.xlu0 %294, %v47
    %v296 = vpop.permute.xlu0 %295
    %v299 = vsel %vm115, %v44, 0
    %v302 = vsel %vm115, %v45, 0
    %304 = vmatprep.subr.mxu0 0.0
    %305 = vmatpush1.msra.mxu0 %v103
    %306 = vmatprep.subr.mxu0 0.0
    %307 = vmatpush1.msra.mxu0 %v104
    %308 = vmatprep.subr.mxu0 0.0
    %309 = vmatpush1.msra.mxu0 0.0
    %310 = vmatprep.subr.mxu0 0.0
    %311 = vmatpush1.msra.mxu0 0.0
    %312 = vmatprep.subr.mxu0 0.0
    %313 = vmatpush1.msra.mxu0 0.0
    %314 = vmatprep.subr.mxu0 0.0
    %315 = vmatpush1.msra.mxu0 0.0
    %316 = vmatprep.subr.mxu0 0.0
    %317 = vmatpush1.msra.mxu0 0.0
    %318 = vmatprep.subr.mxu0 0.0
    %319 = vmatpush1.msra.mxu0 0.0
    %320 = vmatprep.subr.mxu0 0.0
    %321 = vmatpush1.msra.mxu0 0.0
    %322 = vmatprep.subr.mxu0 0.0
    %323 = vmatpush1.msra.mxu0 0.0
    %324 = vmatprep.subr.mxu0 0.0
    %325 = vmatpush1.msra.mxu0 0.0
    %326 = vmatprep.subr.mxu0 0.0
    %327 = vmatpush1.msra.mxu0 0.0
    %328 = vmatprep.subr.mxu0 0.0
    %329 = vmatpush1.msra.mxu0 0.0
    %330 = vmatprep.subr.mxu0 0.0
    %331 = vmatpush1.msra.mxu0 0.0
    %332 = vmatprep.subr.mxu0 0.0
    %333 = vmatpush1.msra.mxu0 0.0
    %334 = vmatprep.subr.mxu0 0.0
    %335 = vmatpush1.msra.mxu0 0.0
    %336 = vmatprep.subr.mxu0 0.0
    %337 = vmatpush1.msra.mxu0 0.0
    %338 = vmatprep.subr.mxu0 0.0
    %339 = vmatpush1.msra.mxu0 0.0
    %340 = vmatprep.subr.mxu0 0.0
    %341 = vmatpush1.msra.mxu0 0.0
    %342 = vmatprep.subr.mxu0 0.0
    %343 = vmatpush1.msra.mxu0 0.0
    %344 = vmatprep.subr.mxu0 0.0
    %345 = vmatpush1.msra.mxu0 0.0
    %346 = vmatprep.subr.mxu0 0.0
    %347 = vmatpush1.msra.mxu0 0.0
    %348 = vmatprep.subr.mxu0 0.0
    %349 = vmatpush1.msra.mxu0 0.0
    %350 = vmatprep.subr.mxu0 0.0
    %351 = vmatpush1.msra.mxu0 0.0
    %352 = vmatprep.subr.mxu0 0.0
    %353 = vmatpush1.msra.mxu0 0.0
    %354 = vmatprep.subr.mxu0 0.0
    %355 = vmatpush1.msra.mxu0 0.0
    %356 = vmatprep.subr.mxu0 0.0
    %357 = vmatpush1.msra.mxu0 0.0
    %358 = vmatprep.subr.mxu0 0.0
    %359 = vmatpush1.msra.mxu0 0.0
    %360 = vmatprep.subr.mxu0 0.0
    %361 = vmatpush1.msra.mxu0 0.0
    %362 = vmatprep.subr.mxu0 0.0
    %363 = vmatpush1.msra.mxu0 0.0
    %364 = vmatprep.subr.mxu0 0.0
    %365 = vmatpush1.msra.mxu0 0.0
    %366 = vmatprep.subr.mxu0 0.0
    %367 = vmatpush1.msra.mxu0 0.0
    %368 = vmatprep.mubr.f32.mxu0 0.0
    %369 = vmatmul.mubr.f32.gmra.mrb[0].mxu0 %v299
    %v370 = vpop.f32.mrb[0].mxu0
    %v371 = vadd.f32 %v291, %v370
    %v372 = vpop.f32.mrb[0].mxu0
    %373 = vmatprep.mubr.f32.mxu0 0.0
    %374 = vmatmul.mubr.f32.gmra.mrb[0].mxu0 %v302
    %v375 = vpop.f32.mrb[0].mxu0
    %v376 = vadd.f32 %v296, %v375
    %v377 = vpop.f32.mrb[0].mxu0
    %378 = vdwg.mxu0
    %379 = vxpose.xlu0.b32.start [1/16] %v189, 128
    %380 = vxpose.xlu0.b32.cont [2/16] %v194, 128
    %381 = vxpose.xlu0.b32.cont [3/16] 0.0, 128
    %382 = vxpose.xlu0.b32.cont [4/16] 0.0, 128
    %383 = vxpose.xlu0.b32.cont [5/16] 0.0, 128
    %384 = vxpose.xlu0.b32.cont [6/16] 0.0, 128
    %385 = vxpose.xlu0.b32.cont [7/16] 0.0, 128
    %386 = vxpose.xlu0.b32.cont [8/16] 0.0, 128
    %387 = vxpose.xlu0.b32.cont [9/16] 0.0, 128
    %388 = vxpose.xlu0.b32.cont [10/16] 0.0, 128
    %389 = vxpose.xlu0.b32.cont [11/16] 0.0, 128
    %390 = vxpose.xlu0.b32.cont [12/16] 0.0, 128
    %391 = vxpose.xlu0.b32.cont [13/16] 0.0, 128
    %392 = vxpose.xlu0.b32.cont [14/16] 0.0, 128
    %393 = vxpose.xlu0.b32.cont [15/16] 0.0, 128
    %394 = vxpose.xlu0.b32.end [16/16] 0.0, 128
    %v395 = vpop.trf.xlu0
    %v396 = vpop.trf.xlu0
    %v397 = vpop.trf.xlu0
    %v398 = vpop.trf.xlu0
    %v399 = vpop.trf.xlu0
    %v400 = vpop.trf.xlu0
    %v401 = vpop.trf.xlu0
    %v402 = vpop.trf.xlu0
    %v403 = vpop.trf.xlu0
    %v404 = vpop.trf.xlu0
    %v405 = vpop.trf.xlu0
    %v406 = vpop.trf.xlu0
    %v407 = vpop.trf.xlu0
    %v408 = vpop.trf.xlu0
    %v409 = vpop.trf.xlu0
    %v410 = vpop.trf.xlu0
    %v412 = vsel %vm115, %v395, 0
    %v415 = vsel %vm115, %v396, 0
    %v418 = vsel %vm115, %v397, 0
    %v421 = vsel %vm115, %v398, 0
    %v424 = vsel %vm115, %v399, 0
    %v427 = vsel %vm115, %v400, 0
    %v430 = vsel %vm115, %v401, 0
    %v433 = vsel %vm115, %v402, 0
    %435 = vmatprep.subr.mxu0 0.0
    %436 = vmatpush1.msra.mxu0 %v280
    %437 = vmatprep.subr.mxu0 0.0
    %438 = vmatpush1.msra.mxu0 %v285
    %439 = vmatprep.subr.mxu0 0.0
    %440 = vmatpush1.msra.mxu0 0.0
    %441 = vmatprep.subr.mxu0 0.0
    %442 = vmatpush1.msra.mxu0 0.0
    %443 = vmatprep.subr.mxu0 0.0
    %444 = vmatpush1.msra.mxu0 0.0
    %445 = vmatprep.subr.mxu0 0.0
    %446 = vmatpush1.msra.mxu0 0.0
    %447 = vmatprep.subr.mxu0 0.0
    %448 = vmatpush1.msra.mxu0 0.0
    %449 = vmatprep.subr.mxu0 0.0
    %450 = vmatpush1.msra.mxu0 0.0
    %451 = vmatprep.subr.mxu0 0.0
    %452 = vmatpush1.msra.mxu0 0.0
    %453 = vmatprep.subr.mxu0 0.0
    %454 = vmatpush1.msra.mxu0 0.0
    %455 = vmatprep.subr.mxu0 0.0
    %456 = vmatpush1.msra.mxu0 0.0
    %457 = vmatprep.subr.mxu0 0.0
    %458 = vmatpush1.msra.mxu0 0.0
    %459 = vmatprep.subr.mxu0 0.0
    %460 = vmatpush1.msra.mxu0 0.0
    %461 = vmatprep.subr.mxu0 0.0
    %462 = vmatpush1.msra.mxu0 0.0
    %463 = vmatprep.subr.mxu0 0.0
    %464 = vmatpush1.msra.mxu0 0.0
    %465 = vmatprep.subr.mxu0 0.0
    %466 = vmatpush1.msra.mxu0 0.0
    %467 = vmatprep.subr.mxu0 0.0
    %468 = vmatpush1.msra.mxu0 0.0
    %469 = vmatprep.subr.mxu0 0.0
    %470 = vmatpush1.msra.mxu0 0.0
    %471 = vmatprep.subr.mxu0 0.0
    %472 = vmatpush1.msra.mxu0 0.0
    %473 = vmatprep.subr.mxu0 0.0
    %474 = vmatpush1.msra.mxu0 0.0
    %475 = vmatprep.subr.mxu0 0.0
    %476 = vmatpush1.msra.mxu0 0.0
    %477 = vmatprep.subr.mxu0 0.0
    %478 = vmatpush1.msra.mxu0 0.0
    %479 = vmatprep.subr.mxu0 0.0
    %480 = vmatpush1.msra.mxu0 0.0
    %481 = vmatprep.subr.mxu0 0.0
    %482 = vmatpush1.msra.mxu0 0.0
    %483 = vmatprep.subr.mxu0 0.0
    %484 = vmatpush1.msra.mxu0 0.0
    %485 = vmatprep.subr.mxu0 0.0
    %486 = vmatpush1.msra.mxu0 0.0
    %487 = vmatprep.subr.mxu0 0.0
    %488 = vmatpush1.msra.mxu0 0.0
    %489 = vmatprep.subr.mxu0 0.0
    %490 = vmatpush1.msra.mxu0 0.0
    %491 = vmatprep.subr.mxu0 0.0
    %492 = vmatpush1.msra.mxu0 0.0
    %493 = vmatprep.subr.mxu0 0.0
    %494 = vmatpush1.msra.mxu0 0.0
    %495 = vmatprep.subr.mxu0 0.0
    %496 = vmatpush1.msra.mxu0 0.0
    %497 = vmatprep.subr.mxu0 0.0
    %498 = vmatpush1.msra.mxu0 0.0
    %499 = vmatprep.mubr.f32.mxu0 0.0
    %500 = vmatmul.mubr.f32.gmra.mrb[0].mxu0 %v412
    %v501 = vpop.f32.mrb[0].mxu0
    %v502 = vadd.f32 0.0, %v501
    %v503 = vpop.f32.mrb[0].mxu0
    %504 = vmatprep.mubr.f32.mxu0 0.0
    %505 = vmatmul.mubr.f32.gmra.mrb[0].mxu0 %v415
    %v506 = vpop.f32.mrb[0].mxu0
    %v507 = vadd.f32 0.0, %v506
    %v508 = vpop.f32.mrb[0].mxu0
    %509 = vmatprep.mubr.f32.mxu0 0.0
    %510 = vmatmul.mubr.f32.gmra.mrb[0].mxu0 %v418
    %v511 = vpop.f32.mrb[0].mxu0
    %v512 = vadd.f32 0.0, %v511
    %v513 = vpop.f32.mrb[0].mxu0
    %514 = vmatprep.mubr.f32.mxu0 0.0
    %515 = vmatmul.mubr.f32.gmra.mrb[0].mxu0 %v421
    %v516 = vpop.f32.mrb[0].mxu0
    %v517 = vadd.f32 0.0, %v516
    %v518 = vpop.f32.mrb[0].mxu0
    %519 = vmatprep.mubr.f32.mxu0 0.0
    %520 = vmatmul.mubr.f32.gmra.mrb[0].mxu0 %v424
    %v521 = vpop.f32.mrb[0].mxu0
    %v522 = vadd.f32 0.0, %v521
    %v523 = vpop.f32.mrb[0].mxu0
    %524 = vmatprep.mubr.f32.mxu0 0.0
    %525 = vmatmul.mubr.f32.gmra.mrb[0].mxu0 %v427
    %v526 = vpop.f32.mrb[0].mxu0
    %v527 = vadd.f32 0.0, %v526
    %v528 = vpop.f32.mrb[0].mxu0
    %529 = vmatprep.mubr.f32.mxu0 0.0
    %530 = vmatmul.mubr.f32.gmra.mrb[0].mxu0 %v430
    %v531 = vpop.f32.mrb[0].mxu0
    %v532 = vadd.f32 0.0, %v531
    %v533 = vpop.f32.mrb[0].mxu0
    %534 = vmatprep.mubr.f32.mxu0 0.0
    %535 = vmatmul.mubr.f32.gmra.mrb[0].mxu0 %v433
    %v536 = vpop.f32.mrb[0].mxu0
    %v537 = vadd.f32 0.0, %v536
    %v538 = vpop.f32.mrb[0].mxu0
    %539 = vdwg.mxu0
    %v540 = vsel %vm64, %v502, -inf
    %541 = vmax.xlane.f32.xlu0 %v540
    %v542 = vpop.xlane.xlu0 %541
    %v543 = vsel %vm64, %v507, -inf
    %544 = vmax.xlane.f32.xlu0 %v543
    %v545 = vpop.xlane.xlu0 %544
    %v546 = vsel %vm64, %v512, -inf
    %547 = vmax.xlane.f32.xlu0 %v546
    %v548 = vpop.xlane.xlu0 %547
    %v549 = vsel %vm64, %v517, -inf
    %550 = vmax.xlane.f32.xlu0 %v549
    %v551 = vpop.xlane.xlu0 %550
    %v552 = vsel %vm64, %v522, -inf
    %553 = vmax.xlane.f32.xlu0 %v552
    %v554 = vpop.xlane.xlu0 %553
    %v555 = vsel %vm64, %v527, -inf
    %556 = vmax.xlane.f32.xlu0 %v555
    %v557 = vpop.xlane.xlu0 %556
    %v558 = vsel %vm64, %v532, -inf
    %559 = vmax.xlane.f32.xlu0 %v558
    %v560 = vpop.xlane.xlu0 %559
    %v561 = vsel %vm64, %v537, -inf
    %562 = vmax.xlane.f32.xlu0 %v561
    %v563 = vpop.xlane.xlu0 %562
    %v564 = vsub.f32 %v502, %v542
    %v565 = vsub.f32 %v507, %v545
    %v566 = vsub.f32 %v512, %v548
    %v567 = vsub.f32 %v517, %v551
    %v568 = vsub.f32 %v522, %v554
    %v569 = vsub.f32 %v527, %v557
    %v570 = vsub.f32 %v532, %v560
    %v571 = vsub.f32 %v537, %v563
    %v572 = vmul.f32 %v564, 1.442695
    %v573 = vpow.pop %v572
    %v574 = vmul.f32 %v565, 1.442695
    %v575 = vpow.pop %v574
    %v576 = vmul.f32 %v566, 1.442695
    %v577 = vpow.pop %v576
    %v578 = vmul.f32 %v567, 1.442695
    %v579 = vpow.pop %v578
    %v580 = vmul.f32 %v568, 1.442695
    %v581 = vpow.pop %v580
    %v582 = vmul.f32 %v569, 1.442695
    %v583 = vpow.pop %v582
    %v584 = vmul.f32 %v570, 1.442695
    %v585 = vpow.pop %v584
    %v586 = vmul.f32 %v571, 1.442695
    %v587 = vpow.pop %v586
    %v588 = vsel %vm64, %v573, 0.0
    %589 = vadd.xlane.f32.xlu0 %v588
    %v590 = vpop.xlane.xlu0 %589
    %v591 = vsel %vm64, %v575, 0.0
    %592 = vadd.xlane.f32.xlu0 %v591
    %v593 = vpop.xlane.xlu0 %592
    %v594 = vsel %vm64, %v577, 0.0
    %595 = vadd.xlane.f32.xlu0 %v594
    %v596 = vpop.xlane.xlu0 %595
    %v597 = vsel %vm64, %v579, 0.0
    %598 = vadd.xlane.f32.xlu0 %v597
    %v599 = vpop.xlane.xlu0 %598
    %v600 = vsel %vm64, %v581, 0.0
    %601 = vadd.xlane.f32.xlu0 %v600
    %v602 = vpop.xlane.xlu0 %601
    %v603 = vsel %vm64, %v583, 0.0
    %604 = vadd.xlane.f32.xlu0 %v603
    %v605 = vpop.xlane.xlu0 %604
    %v606 = vsel %vm64, %v585, 0.0
    %607 = vadd.xlane.f32.xlu0 %v606
    %v608 = vpop.xlane.xlu0 %607
    %v609 = vsel %vm64, %v587, 0.0
    %610 = vadd.xlane.f32.xlu0 %v609
    %v611 = vpop.xlane.xlu0 %610
    %v612 = vrcp.pop %v590
    %v613 = vrcp.pop %v593
    %v614 = vrcp.pop %v596
    %v615 = vrcp.pop %v599
    %v616 = vrcp.pop %v602
    %v617 = vrcp.pop %v605
    %v618 = vrcp.pop %v608
    %v619 = vrcp.pop %v611
    %v620 = vmul.f32 %v573, %v612
    %v621 = vmul.f32 %v575, %v613
    %v622 = vmul.f32 %v577, %v614
    %v623 = vmul.f32 %v579, %v615
    %v624 = vmul.f32 %v581, %v616
    %v625 = vmul.f32 %v583, %v617
    %v626 = vmul.f32 %v585, %v618
    %v627 = vmul.f32 %v587, %v619
    %v629 = vsel %vm64, %v371, 0
    %v632 = vsel %vm64, %v376, 0
    %v635 = vsel %vm64, %v620, 0
    %v638 = vsel %vm64, %v621, 0
    %v641 = vsel %vm64, %v622, 0
    %v644 = vsel %vm64, %v623, 0
    %v647 = vsel %vm64, %v624, 0
    %v650 = vsel %vm64, %v625, 0
    %v653 = vsel %vm64, %v626, 0
    %v656 = vsel %vm64, %v627, 0
    %658 = vmatprep.subr.mxu0 0.0
    %659 = vmatpush1.xpose.msra.mxu0 %v635
    %660 = vmatprep.subr.mxu0 0.0
    %661 = vmatpush1.xpose.msra.mxu0 %v638
    %662 = vmatprep.subr.mxu0 0.0
    %663 = vmatpush1.xpose.msra.mxu0 %v641
    %664 = vmatprep.subr.mxu0 0.0
    %665 = vmatpush1.xpose.msra.mxu0 %v644
    %666 = vmatprep.subr.mxu0 0.0
    %667 = vmatpush1.xpose.msra.mxu0 %v647
    %668 = vmatprep.subr.mxu0 0.0
    %669 = vmatpush1.xpose.msra.mxu0 %v650
    %670 = vmatprep.subr.mxu0 0.0
    %671 = vmatpush1.xpose.msra.mxu0 %v653
    %672 = vmatprep.subr.mxu0 0.0
    %673 = vmatpush1.xpose.msra.mxu0 %v656
    %674 = vmatprep.subr.mxu0 0.0
    %675 = vmatpush1.xpose.msra.mxu0 0.0
    %676 = vmatprep.subr.mxu0 0.0
    %677 = vmatpush1.xpose.msra.mxu0 0.0
    %678 = vmatprep.subr.mxu0 0.0
    %679 = vmatpush1.xpose.msra.mxu0 0.0
    %680 = vmatprep.subr.mxu0 0.0
    %681 = vmatpush1.xpose.msra.mxu0 0.0
    %682 = vmatprep.subr.mxu0 0.0
    %683 = vmatpush1.xpose.msra.mxu0 0.0
    %684 = vmatprep.subr.mxu0 0.0
    %685 = vmatpush1.xpose.msra.mxu0 0.0
    %686 = vmatprep.subr.mxu0 0.0
    %687 = vmatpush1.xpose.msra.mxu0 0.0
    %688 = vmatprep.subr.mxu0 0.0
    %689 = vmatpush1.xpose.msra.mxu0 0.0
    %690 = vmatprep.subr.mxu0 0.0
    %691 = vmatpush1.xpose.msra.mxu0 0.0
    %692 = vmatprep.subr.mxu0 0.0
    %693 = vmatpush1.xpose.msra.mxu0 0.0
    %694 = vmatprep.subr.mxu0 0.0
    %695 = vmatpush1.xpose.msra.mxu0 0.0
    %696 = vmatprep.subr.mxu0 0.0
    %697 = vmatpush1.xpose.msra.mxu0 0.0
    %698 = vmatprep.subr.mxu0 0.0
    %699 = vmatpush1.xpose.msra.mxu0 0.0
    %700 = vmatprep.subr.mxu0 0.0
    %701 = vmatpush1.xpose.msra.mxu0 0.0
    %702 = vmatprep.subr.mxu0 0.0
    %703 = vmatpush1.xpose.msra.mxu0 0.0
    %704 = vmatprep.subr.mxu0 0.0
    %705 = vmatpush1.xpose.msra.mxu0 0.0
    %706 = vmatprep.subr.mxu0 0.0
    %707 = vmatpush1.xpose.msra.mxu0 0.0
    %708 = vmatprep.subr.mxu0 0.0
    %709 = vmatpush1.xpose.msra.mxu0 0.0
    %710 = vmatprep.subr.mxu0 0.0
    %711 = vmatpush1.xpose.msra.mxu0 0.0
    %712 = vmatprep.subr.mxu0 0.0
    %713 = vmatpush1.xpose.msra.mxu0 0.0
    %714 = vmatprep.subr.mxu0 0.0
    %715 = vmatpush1.xpose.msra.mxu0 0.0
    %716 = vmatprep.subr.mxu0 0.0
    %717 = vmatpush1.xpose.msra.mxu0 0.0
    %718 = vmatprep.subr.mxu0 0.0
    %719 = vmatpush1.xpose.msra.mxu0 0.0
    %720 = vmatprep.subr.mxu0 0.0
    %721 = vmatpush1.xpose.msra.mxu0 0.0
    %722 = vmatprep.mubr.f32.mxu0 0.0
    %723 = vmatmul.mubr.f32.gmra.mrb[0].mxu0 %v629
    %v724 = vpop.f32.mrb[0].mxu0
    %v725 = vadd.f32 0.0, %v724
    %v726 = vpop.f32.mrb[0].mxu0
    %727 = vmatprep.mubr.f32.mxu0 0.0
    %728 = vmatmul.mubr.f32.gmra.mrb[0].mxu0 %v632
    %v729 = vpop.f32.mrb[0].mxu0
    %v730 = vadd.f32 0.0, %v729
    %v731 = vpop.f32.mrb[0].mxu0
    %732 = vdwg.mxu0
    %v733 = vmax.f32 %v725, 0.0
    %v734 = vmax.f32 %v730, 0.0
    %v735 = vmax.f32 %v62, 0.0
    %v736 = vmax.f32 %v63, 0.0
    %v738 = vsel %vm115, %v52, 0
    %v741 = vsel %vm115, %v53, 0
    %v744 = vsel %vm115, %v54, 0
    %v747 = vsel %vm115, %v55, 0
    %749 = vmatprep.subr.mxu0 0.0
    %750 = vmatpush1.msra.mxu0 %v735
    %751 = vmatprep.subr.mxu0 0.0
    %752 = vmatpush1.msra.mxu0 %v736
    %753 = vmatprep.subr.mxu0 0.0
    %754 = vmatpush1.msra.mxu0 0.0
    %755 = vmatprep.subr.mxu0 0.0
    %756 = vmatpush1.msra.mxu0 0.0
    %757 = vmatprep.subr.mxu0 0.0
    %758 = vmatpush1.msra.mxu0 0.0
    %759 = vmatprep.subr.mxu0 0.0
    %760 = vmatpush1.msra.mxu0 0.0
    %761 = vmatprep.subr.mxu0 0.0
    %762 = vmatpush1.msra.mxu0 0.0
    %763 = vmatprep.subr.mxu0 0.0
    %764 = vmatpush1.msra.mxu0 0.0
    %765 = vmatprep.subr.mxu0 0.0
    %766 = vmatpush1.msra.mxu0 0.0
    %767 = vmatprep.subr.mxu0 0.0
    %768 = vmatpush1.msra.mxu0 0.0
    %769 = vmatprep.subr.mxu0 0.0
    %770 = vmatpush1.msra.mxu0 0.0
    %771 = vmatprep.subr.mxu0 0.0
    %772 = vmatpush1.msra.mxu0 0.0
    %773 = vmatprep.subr.mxu0 0.0
    %774 = vmatpush1.msra.mxu0 0.0
    %775 = vmatprep.subr.mxu0 0.0
    %776 = vmatpush1.msra.mxu0 0.0
    %777 = vmatprep.subr.mxu0 0.0
    %778 = vmatpush1.msra.mxu0 0.0
    %779 = vmatprep.subr.mxu0 0.0
    %780 = vmatpush1.msra.mxu0 0.0
    %781 = vmatprep.subr.mxu0 0.0
    %782 = vmatpush1.msra.mxu0 0.0
    %783 = vmatprep.subr.mxu0 0.0
    %784 = vmatpush1.msra.mxu0 0.0
    %785 = vmatprep.subr.mxu0 0.0
    %786 = vmatpush1.msra.mxu0 0.0
    %787 = vmatprep.subr.mxu0 0.0
    %788 = vmatpush1.msra.mxu0 0.0
    %789 = vmatprep.subr.mxu0 0.0
    %790 = vmatpush1.msra.mxu0 0.0
    %791 = vmatprep.subr.mxu0 0.0
    %792 = vmatpush1.msra.mxu0 0.0
    %793 = vmatprep.subr.mxu0 0.0
    %794 = vmatpush1.msra.mxu0 0.0
    %795 = vmatprep.subr.mxu0 0.0
    %796 = vmatpush1.msra.mxu0 0.0
    %797 = vmatprep.subr.mxu0 0.0
    %798 = vmatpush1.msra.mxu0 0.0
    %799 = vmatprep.subr.mxu0 0.0
    %800 = vmatpush1.msra.mxu0 0.0
    %801 = vmatprep.subr.mxu0 0.0
    %802 = vmatpush1.msra.mxu0 0.0
    %803 = vmatprep.subr.mxu0 0.0
    %804 = vmatpush1.msra.mxu0 0.0
    %805 = vmatprep.subr.mxu0 0.0
    %806 = vmatpush1.msra.mxu0 0.0
    %807 = vmatprep.subr.mxu0 0.0
    %808 = vmatpush1.msra.mxu0 0.0
    %809 = vmatprep.subr.mxu0 0.0
    %810 = vmatpush1.msra.mxu0 0.0
    %811 = vmatprep.subr.mxu0 0.0
    %812 = vmatpush1.msra.mxu0 0.0
    %813 = vmatprep.mubr.f32.mxu0 0.0
    %814 = vmatmul.mubr.f32.gmra.mrb[0].mxu0 %v738
    %v815 = vpop.f32.mrb[0].mxu0
    %v816 = vadd.f32 0.0, %v815
    %v817 = vpop.f32.mrb[0].mxu0
    %818 = vmatprep.mubr.f32.mxu0 0.0
    %819 = vmatmul.mubr.f32.gmra.mrb[0].mxu0 %v741
    %v820 = vpop.f32.mrb[0].mxu0
    %v821 = vadd.f32 0.0, %v820
    %v822 = vpop.f32.mrb[0].mxu0
    %823 = vmatprep.mubr.f32.mxu0 0.0
    %824 = vmatmul.mubr.f32.gmra.mrb[0].mxu0 %v744
    %v825 = vpop.f32.mrb[0].mxu0
    %v826 = vadd.f32 0.0, %v825
    %v827 = vpop.f32.mrb[0].mxu0
    %828 = vmatprep.mubr.f32.mxu0 0.0
    %829 = vmatmul.mubr.f32.gmra.mrb[0].mxu0 %v747
    %v830 = vpop.f32.mrb[0].mxu0
    %v831 = vadd.f32 0.0, %v830
    %v832 = vpop.f32.mrb[0].mxu0
    %833 = vdwg.mxu0
    %v835 = vsel %vm115, %v48, 0
    %v838 = vsel %vm115, %v49, 0
    %v841 = vsel %vm115, %v50, 0
    %v844 = vsel %vm115, %v51, 0
    %846 = vmatprep.subr.mxu0 0.0
    %847 = vmatpush1.msra.mxu0 %v733
    %848 = vmatprep.subr.mxu0 0.0
    %849 = vmatpush1.msra.mxu0 %v734
    %850 = vmatprep.subr.mxu0 0.0
    %851 = vmatpush1.msra.mxu0 0.0
    %852 = vmatprep.subr.mxu0 0.0
    %853 = vmatpush1.msra.mxu0 0.0
    %854 = vmatprep.subr.mxu0 0.0
    %855 = vmatpush1.msra.mxu0 0.0
    %856 = vmatprep.subr.mxu0 0.0
    %857 = vmatpush1.msra.mxu0 0.0
    %858 = vmatprep.subr.mxu0 0.0
    %859 = vmatpush1.msra.mxu0 0.0
    %860 = vmatprep.subr.mxu0 0.0
    %861 = vmatpush1.msra.mxu0 0.0
    %862 = vmatprep.subr.mxu0 0.0
    %863 = vmatpush1.msra.mxu0 0.0
    %864 = vmatprep.subr.mxu0 0.0
    %865 = vmatpush1.msra.mxu0 0.0
    %866 = vmatprep.subr.mxu0 0.0
    %867 = vmatpush1.msra.mxu0 0.0
    %868 = vmatprep.subr.mxu0 0.0
    %869 = vmatpush1.msra.mxu0 0.0
    %870 = vmatprep.subr.mxu0 0.0
    %871 = vmatpush1.msra.mxu0 0.0
    %872 = vmatprep.subr.mxu0 0.0
    %873 = vmatpush1.msra.mxu0 0.0
    %874 = vmatprep.subr.mxu0 0.0
    %875 = vmatpush1.msra.mxu0 0.0
    %876 = vmatprep.subr.mxu0 0.0
    %877 = vmatpush1.msra.mxu0 0.0
    %878 = vmatprep.subr.mxu0 0.0
    %879 = vmatpush1.msra.mxu0 0.0
    %880 = vmatprep.subr.mxu0 0.0
    %881 = vmatpush1.msra.mxu0 0.0
    %882 = vmatprep.subr.mxu0 0.0
    %883 = vmatpush1.msra.mxu0 0.0
    %884 = vmatprep.subr.mxu0 0.0
    %885 = vmatpush1.msra.mxu0 0.0
    %886 = vmatprep.subr.mxu0 0.0
    %887 = vmatpush1.msra.mxu0 0.0
    %888 = vmatprep.subr.mxu0 0.0
    %889 = vmatpush1.msra.mxu0 0.0
    %890 = vmatprep.subr.mxu0 0.0
    %891 = vmatpush1.msra.mxu0 0.0
    %892 = vmatprep.subr.mxu0 0.0
    %893 = vmatpush1.msra.mxu0 0.0
    %894 = vmatprep.subr.mxu0 0.0
    %895 = vmatpush1.msra.mxu0 0.0
    %896 = vmatprep.subr.mxu0 0.0
    %897 = vmatpush1.msra.mxu0 0.0
    %898 = vmatprep.subr.mxu0 0.0
    %899 = vmatpush1.msra.mxu0 0.0
    %900 = vmatprep.subr.mxu0 0.0
    %901 = vmatpush1.msra.mxu0 0.0
    %902 = vmatprep.subr.mxu0 0.0
    %903 = vmatpush1.msra.mxu0 0.0
    %904 = vmatprep.subr.mxu0 0.0
    %905 = vmatpush1.msra.mxu0 0.0
    %906 = vmatprep.subr.mxu0 0.0
    %907 = vmatpush1.msra.mxu0 0.0
    %908 = vmatprep.subr.mxu0 0.0
    %909 = vmatpush1.msra.mxu0 0.0
    %910 = vmatprep.mubr.f32.mxu0 0.0
    %911 = vmatmul.mubr.f32.gmra.mrb[0].mxu0 %v835
    %v912 = vpop.f32.mrb[0].mxu0
    %v913 = vadd.f32 %v816, %v912
    %v914 = vpop.f32.mrb[0].mxu0
    %915 = vmatprep.mubr.f32.mxu0 0.0
    %916 = vmatmul.mubr.f32.gmra.mrb[0].mxu0 %v838
    %v917 = vpop.f32.mrb[0].mxu0
    %v918 = vadd.f32 %v821, %v917
    %v919 = vpop.f32.mrb[0].mxu0
    %920 = vmatprep.mubr.f32.mxu0 0.0
    %921 = vmatmul.mubr.f32.gmra.mrb[0].mxu0 %v841
    %v922 = vpop.f32.mrb[0].mxu0
    %v923 = vadd.f32 %v826, %v922
    %v924 = vpop.f32.mrb[0].mxu0
    %925 = vmatprep.mubr.f32.mxu0 0.0
    %926 = vmatmul.mubr.f32.gmra.mrb[0].mxu0 %v844
    %v927 = vpop.f32.mrb[0].mxu0
    %v928 = vadd.f32 %v831, %v927
    %v929 = vpop.f32.mrb[0].mxu0
    %930 = vdwg.mxu0
    %932 = vset.pattern.permute.xlu0 0
    %933 = vperm.xlu0 %932, %v56
    %v934 = vpop.permute.xlu0 %933
    %937 = vset.pattern.permute.xlu0 0
    %938 = vperm.xlu0 %937, %v57
    %v939 = vpop.permute.xlu0 %938
    %942 = vset.pattern.permute.xlu0 0
    %943 = vperm.xlu0 %942, %v58
    %v944 = vpop.permute.xlu0 %943
    %947 = vset.pattern.permute.xlu0 0
    %948 = vperm.xlu0 %947, %v59
    %v949 = vpop.permute.xlu0 %948
    %v951 = vadd.f32 %v913, %v934
    %v952 = vadd.f32 %v918, %v939
    %v953 = vadd.f32 %v923, %v944
    %v954 = vadd.f32 %v928, %v949
    %955 = vst.msk [vmem:[#allocation2] sm:$0xff] %vm64, %v951
    %956 = vst.msk [vmem:[#allocation2 + $0x8] sm:$0xff] %vm64, %v952
    %957 = vst.msk [vmem:[#allocation2 + $0x10] sm:$0xff] %vm64, %v953
    %958 = vst.msk [vmem:[#allocation2 + $0x18] sm:$0xff] %vm64, %v954
    %s959 = scalar_lea.vmem %s0, 32
    %v960 = vld [vmem:[%s959] sm:$0xff]
    %v961 = vld [vmem:[%s959 + $0x8] sm:$0xff]
    %v962 = vld [vmem:[%s959 + $0x10] sm:$0xff]
    %v963 = vld [vmem:[%s959 + $0x18] sm:$0xff]
    %v964 = vsel %vm64, %v960, 0.0
    %v965 = vsel %vm64, %v961, 0.0
    %v966 = vadd.f32 %v964, %v965
    %967 = vadd.xlane.f32.xlu0 %v966
    %v968 = vpop.xlane.xlu0 %967
    %v969 = vrot.slane %v968, 4
    %v970 = vadd.f32 %v968, %v969
    %v971 = vrot.slane %v970, 2
    %v972 = vadd.f32 %v970, %v971
    %v973 = vrot.slane %v972, 1
    %v974 = vadd.f32 %v972, %v973
    %s975 = vtos %v974
    %v976 = vmul.f32 %v960, %v960
    %v977 = vmul.f32 %v961, %v961
    %v978 = vsel %vm64, %v976, 0.0
    %v979 = vsel %vm64, %v977, 0.0
    %v980 = vadd.f32 %v978, %v979
    %981 = vadd.xlane.f32.xlu0 %v980
    %v982 = vpop.xlane.xlu0 %981
    %v983 = vrot.slane %v982, 4
    %v984 = vadd.f32 %v982, %v983
    %v985 = vrot.slane %v984, 2
    %v986 = vadd.f32 %v984, %v985
    %v987 = vrot.slane %v986, 1
    %v988 = vadd.f32 %v986, %v987
    %s989 = vtos %v988
    %s990 = smul.f32 %s975, 0.0009765625
    %s991 = smul.f32 %s989, 0.0009765625
    %s992 = smul.f32 %s990, %s990
    %s993 = ssub.f32 %s991, %s992
    %v994 = vstv %s990
    %v995 = vsub.f32 %v960, %v994
    %v996 = vsub.f32 %v961, %v994
    %s997 = sadd.f32 %s993, 1e-05
    %v998 = vstv %s997
    %v999 = vrsqrt.pop %v998
    %s1000 = vtos %v999
    %v1001 = vstv %s1000
    %v1002 = vmul.f32 %v995, %v1001
    %v1003 = vmul.f32 %v996, %v1001
    %1004 = vmatprep.subr.mxu0 0.0
    %1005 = vmatpush1.msra.mxu0 %v1002
    %1006 = vmatprep.subr.mxu0 0.0
    %1007 = vmatpush1.msra.mxu0 %v1003
    %1008 = vmatprep.subr.mxu0 0.0
    %1009 = vmatpush1.msra.mxu0 0.0
    %1010 = vmatprep.subr.mxu0 0.0
    %1011 = vmatpush1.msra.mxu0 0.0
    %1012 = vmatprep.subr.mxu0 0.0
    %1013 = vmatpush1.msra.mxu0 0.0
    %1014 = vmatprep.subr.mxu0 0.0
    %1015 = vmatpush1.msra.mxu0 0.0
    %1016 = vmatprep.subr.mxu0 0.0
    %1017 = vmatpush1.msra.mxu0 0.0
    %1018 = vmatprep.subr.mxu0 0.0
    %1019 = vmatpush1.msra.mxu0 0.0
    %1020 = vmatprep.subr.mxu0 0.0
    %1021 = vmatpush1.msra.mxu0 0.0
    %1022 = vmatprep.subr.mxu0 0.0
    %1023 = vmatpush1.msra.mxu0 0.0
    %1024 = vmatprep.subr.mxu0 0.0
    %1025 = vmatpush1.msra.mxu0 0.0
    %1026 = vmatprep.subr.mxu0 0.0
    %1027 = vmatpush1.msra.mxu0 0.0
    %1028 = vmatprep.subr.mxu0 0.0
    %1029 = vmatpush1.msra.mxu0 0.0
    %1030 = vmatprep.subr.mxu0 0.0
    %1031 = vmatpush1.msra.mxu0 0.0
    %1032 = vmatprep.subr.mxu0 0.0
    %1033 = vmatpush1.msra.mxu0 0.0
    %1034 = vmatprep.subr.mxu0 0.0
    %1035 = vmatpush1.msra.mxu0 0.0
    %1036 = vmatprep.subr.mxu0 0.0
    %1037 = vmatpush1.msra.mxu0 0.0
    %1038 = vmatprep.subr.mxu0 0.0
    %1039 = vmatpush1.msra.mxu0 0.0
    %1040 = vmatprep.subr.mxu0 0.0
    %1041 = vmatpush1.msra.mxu0 0.0
    %1042 = vmatprep.subr.mxu0 0.0
    %1043 = vmatpush1.msra.mxu0 0.0
    %1044 = vmatprep.subr.mxu0 0.0
    %1045 = vmatpush1.msra.mxu0 0.0
    %1046 = vmatprep.subr.mxu0 0.0
    %1047 = vmatpush1.msra.mxu0 0.0
    %1048 = vmatprep.subr.mxu0 0.0
    %1049 = vmatpush1.msra.mxu0 0.0
    %1050 = vmatprep.subr.mxu0 0.0
    %1051 = vmatpush1.msra.mxu0 0.0
    %1052 = vmatprep.subr.mxu0 0.0
    %1053 = vmatpush1.msra.mxu0 0.0
    %1054 = vmatprep.subr.mxu0 0.0
    %1055 = vmatpush1.msra.mxu0 0.0
    %1056 = vmatprep.subr.mxu0 0.0
    %1057 = vmatpush1.msra.mxu0 0.0
    %1058 = vmatprep.subr.mxu0 0.0
    %1059 = vmatpush1.msra.mxu0 0.0
    %1060 = vmatprep.subr.mxu0 0.0
    %1061 = vmatpush1.msra.mxu0 0.0
    %1062 = vmatprep.subr.mxu0 0.0
    %1063 = vmatpush1.msra.mxu0 0.0
    %1064 = vmatprep.subr.mxu0 0.0
    %1065 = vmatpush1.msra.mxu0 0.0
    %1066 = vmatprep.subr.mxu0 0.0
    %1067 = vmatpush1.msra.mxu0 0.0
    %1068 = vmatprep.mubr.f32.mxu0 0.0
    %1069 = vmatmul.mubr.f32.gmra.mrb[0].mxu0 %v117
    %v1070 = vpop.f32.mrb[0].mxu0
    %v1071 = vadd.f32 %v108, %v1070
    %v1072 = vpop.f32.mrb[0].mxu0
    %1073 = vmatprep.mubr.f32.mxu0 0.0
    %1074 = vmatmul.mubr.f32.gmra.mrb[0].mxu0 %v120
    %v1075 = vpop.f32.mrb[0].mxu0
    %v1076 = vadd.f32 %v113, %v1075
    %v1077 = vpop.f32.mrb[0].mxu0
    %1078 = vdwg.mxu0
    %1079 = vmatprep.subr.mxu0 0.0
    %1080 = vmatpush1.msra.mxu0 %v1002
    %1081 = vmatprep.subr.mxu0 0.0
    %1082 = vmatpush1.msra.mxu0 %v1003
    %1083 = vmatprep.subr.mxu0 0.0
    %1084 = vmatpush1.msra.mxu0 0.0
    %1085 = vmatprep.subr.mxu0 0.0
    %1086 = vmatpush1.msra.mxu0 0.0
    %1087 = vmatprep.subr.mxu0 0.0
    %1088 = vmatpush1.msra.mxu0 0.0
    %1089 = vmatprep.subr.mxu0 0.0
    %1090 = vmatpush1.msra.mxu0 0.0
    %1091 = vmatprep.subr.mxu0 0.0
    %1092 = vmatpush1.msra.mxu0 0.0
    %1093 = vmatprep.subr.mxu0 0.0
    %1094 = vmatpush1.msra.mxu0 0.0
    %1095 = vmatprep.subr.mxu0 0.0
    %1096 = vmatpush1.msra.mxu0 0.0
    %1097 = vmatprep.subr.mxu0 0.0
    %1098 = vmatpush1.msra.mxu0 0.0
    %1099 = vmatprep.subr.mxu0 0.0
    %1100 = vmatpush1.msra.mxu0 0.0
    %1101 = vmatprep.subr.mxu0 0.0
    %1102 = vmatpush1.msra.mxu0 0.0
    %1103 = vmatprep.subr.mxu0 0.0
    %1104 = vmatpush1.msra.mxu0 0.0
    %1105 = vmatprep.subr.mxu0 0.0
    %1106 = vmatpush1.msra.mxu0 0.0
    %1107 = vmatprep.subr.mxu0 0.0
    %1108 = vmatpush1.msra.mxu0 0.0
    %1109 = vmatprep.subr.mxu0 0.0
    %1110 = vmatpush1.msra.mxu0 0.0
    %1111 = vmatprep.subr.mxu0 0.0
    %1112 = vmatpush1.msra.mxu0 0.0
    %1113 = vmatprep.subr.mxu0 0.0
    %1114 = vmatpush1.msra.mxu0 0.0
    %1115 = vmatprep.subr.mxu0 0.0
    %1116 = vmatpush1.msra.mxu0 0.0
    %1117 = vmatprep.subr.mxu0 0.0
    %1118 = vmatpush1.msra.mxu0 0.0
    %1119 = vmatprep.subr.mxu0 0.0
    %1120 = vmatpush1.msra.mxu0 0.0
    %1121 = vmatprep.subr.mxu0 0.0
    %1122 = vmatpush1.msra.mxu0 0.0
    %1123 = vmatprep.subr.mxu0 0.0
    %1124 = vmatpush1.msra.mxu0 0.0
    %1125 = vmatprep.subr.mxu0 0.0
    %1126 = vmatpush1.msra.mxu0 0.0
    %1127 = vmatprep.subr.mxu0 0.0
    %1128 = vmatpush1.msra.mxu0 0.0
    %1129 = vmatprep.subr.mxu0 0.0
    %1130 = vmatpush1.msra.mxu0 0.0
    %1131 = vmatprep.subr.mxu0 0.0
    %1132 = vmatpush1.msra.mxu0 0.0
    %1133 = vmatprep.subr.mxu0 0.0
    %1134 = vmatpush1.msra.mxu0 0.0
    %1135 = vmatprep.subr.mxu0 0.0
    %1136 = vmatpush1.msra.mxu0 0.0
    %1137 = vmatprep.subr.mxu0 0.0
    %1138 = vmatpush1.msra.mxu0 0.0
    %1139 = vmatprep.subr.mxu0 0.0
    %1140 = vmatpush1.msra.mxu0 0.0
    %1141 = vmatprep.subr.mxu0 0.0
    %1142 = vmatpush1.msra.mxu0 0.0
    %1143 = vmatprep.mubr.f32.mxu0 0.0
    %1144 = vmatmul.mubr.f32.gmra.mrb[0].mxu0 %v208
    %v1145 = vpop.f32.mrb[0].mxu0
    %v1146 = vadd.f32 %v200, %v1145
    %v1147 = vpop.f32.mrb[0].mxu0
    %1148 = vmatprep.mubr.f32.mxu0 0.0
    %1149 = vmatmul.mubr.f32.gmra.mrb[0].mxu0 %v211
    %v1150 = vpop.f32.mrb[0].mxu0
    %v1151 = vadd.f32 %v205, %v1150
    %v1152 = vpop.f32.mrb[0].mxu0
    %1153 = vdwg.mxu0
    %1154 = vmatprep.subr.mxu0 0.0
    %1155 = vmatpush1.msra.mxu0 %v1002
    %1156 = vmatprep.subr.mxu0 0.0
    %1157 = vmatpush1.msra.mxu0 %v1003
    %1158 = vmatprep.subr.mxu0 0.0
    %1159 = vmatpush1.msra.mxu0 0.0
    %1160 = vmatprep.subr.mxu0 0.0
    %1161 = vmatpush1.msra.mxu0 0.0
    %1162 = vmatprep.subr.mxu0 0.0
    %1163 = vmatpush1.msra.mxu0 0.0
    %1164 = vmatprep.subr.mxu0 0.0
    %1165 = vmatpush1.msra.mxu0 0.0
    %1166 = vmatprep.subr.mxu0 0.0
    %1167 = vmatpush1.msra.mxu0 0.0
    %1168 = vmatprep.subr.mxu0 0.0
    %1169 = vmatpush1.msra.mxu0 0.0
    %1170 = vmatprep.subr.mxu0 0.0
    %1171 = vmatpush1.msra.mxu0 0.0
    %1172 = vmatprep.subr.mxu0 0.0
    %1173 = vmatpush1.msra.mxu0 0.0
    %1174 = vmatprep.subr.mxu0 0.0
    %1175 = vmatpush1.msra.mxu0 0.0
    %1176 = vmatprep.subr.mxu0 0.0
    %1177 = vmatpush1.msra.mxu0 0.0
    %1178 = vmatprep.subr.mxu0 0.0
    %1179 = vmatpush1.msra.mxu0 0.0
    %1180 = vmatprep.subr.mxu0 0.0
    %1181 = vmatpush1.msra.mxu0 0.0
    %1182 = vmatprep.subr.mxu0 0.0
    %1183 = vmatpush1.msra.mxu0 0.0
    %1184 = vmatprep.subr.mxu0 0.0
    %1185 = vmatpush1.msra.mxu0 0.0
    %1186 = vmatprep.subr.mxu0 0.0
    %1187 = vmatpush1.msra.mxu0 0.0
    %1188 = vmatprep.subr.mxu0 0.0
    %1189 = vmatpush1.msra.mxu0 0.0
    %1190 = vmatprep.subr.mxu0 0.0
    %1191 = vmatpush1.msra.mxu0 0.0
    %1192 = vmatprep.subr.mxu0 0.0
    %1193 = vmatpush1.msra.mxu0 0.0
    %1194 = vmatprep.subr.mxu0 0.0
    %1195 = vmatpush1.msra.mxu0 0.0
    %1196 = vmatprep.subr.mxu0 0.0
    %1197 = vmatpush1.msra.mxu0 0.0
    %1198 = vmatprep.subr.mxu0 0.0
    %1199 = vmatpush1.msra.mxu0 0.0
    %1200 = vmatprep.subr.mxu0 0.0
    %1201 = vmatpush1.msra.mxu0 0.0
    %1202 = vmatprep.subr.mxu0 0.0
    %1203 = vmatpush1.msra.mxu0 0.0
    %1204 = vmatprep.subr.mxu0 0.0
    %1205 = vmatpush1.msra.mxu0 0.0
    %1206 = vmatprep.subr.mxu0 0.0
    %1207 = vmatpush1.msra.mxu0 0.0
    %1208 = vmatprep.subr.mxu0 0.0
    %1209 = vmatpush1.msra.mxu0 0.0
    %1210 = vmatprep.subr.mxu0 0.0
    %1211 = vmatpush1.msra.mxu0 0.0
    %1212 = vmatprep.subr.mxu0 0.0
    %1213 = vmatpush1.msra.mxu0 0.0
    %1214 = vmatprep.subr.mxu0 0.0
    %1215 = vmatpush1.msra.mxu0 0.0
    %1216 = vmatprep.subr.mxu0 0.0
    %1217 = vmatpush1.msra.mxu0 0.0
    %1218 = vmatprep.mubr.f32.mxu0 0.0
    %1219 = vmatmul.mubr.f32.gmra.mrb[0].mxu0 %v299
    %v1220 = vpop.f32.mrb[0].mxu0
    %v1221 = vadd.f32 %v291, %v1220
    %v1222 = vpop.f32.mrb[0].mxu0
    %1223 = vmatprep.mubr.f32.mxu0 0.0
    %1224 = vmatmul.mubr.f32.gmra.mrb[0].mxu0 %v302
    %v1225 = vpop.f32.mrb[0].mxu0
    %v1226 = vadd.f32 %v296, %v1225
    %v1227 = vpop.f32.mrb[0].mxu0
    %1228 = vdwg.mxu0
    %1229 = vxpose.xlu0.b32.start [1/16] %v1071, 128
    %1230 = vxpose.xlu0.b32.cont [2/16] %v1076, 128
    %1231 = vxpose.xlu0.b32.cont [3/16] 0.0, 128
    %1232 = vxpose.xlu0.b32.cont [4/16] 0.0, 128
    %1233 = vxpose.xlu0.b32.cont [5/16] 0.0, 128
    %1234 = vxpose.xlu0.b32.cont [6/16] 0.0, 128
    %1235 = vxpose.xlu0.b32.cont [7/16] 0.0, 128
    %1236 = vxpose.xlu0.b32.cont [8/16] 0.0, 128
    %1237 = vxpose.xlu0.b32.cont [9/16] 0.0, 128
    %1238 = vxpose.xlu0.b32.cont [10/16] 0.0, 128
    %1239 = vxpose.xlu0.b32.cont [11/16] 0.0, 128
    %1240 = vxpose.xlu0.b32.cont [12/16] 0.0, 128
    %1241 = vxpose.xlu0.b32.cont [13/16] 0.0, 128
    %1242 = vxpose.xlu0.b32.cont [14/16] 0.0, 128
    %1243 = vxpose.xlu0.b32.cont [15/16] 0.0, 128
    %1244 = vxpose.xlu0.b32.end [16/16] 0.0, 128
    %v1245 = vpop.trf.xlu0
    %v1246 = vpop.trf.xlu0
    %v1247 = vpop.trf.xlu0
    %v1248 = vpop.trf.xlu0
    %v1249 = vpop.trf.xlu0
    %v1250 = vpop.trf.xlu0
    %v1251 = vpop.trf.xlu0
    %v1252 = vpop.trf.xlu0
    %v1253 = vpop.trf.xlu0
    %v1254 = vpop.trf.xlu0
    %v1255 = vpop.trf.xlu0
    %v1256 = vpop.trf.xlu0
    %v1257 = vpop.trf.xlu0
    %v1258 = vpop.trf.xlu0
    %v1259 = vpop.trf.xlu0
    %v1260 = vpop.trf.xlu0
    %v1262 = vsel %vm115, %v1245, 0
    %v1265 = vsel %vm115, %v1246, 0
    %v1268 = vsel %vm115, %v1247, 0
    %v1271 = vsel %vm115, %v1248, 0
    %v1274 = vsel %vm115, %v1249, 0
    %v1277 = vsel %vm115, %v1250, 0
    %v1280 = vsel %vm115, %v1251, 0
    %v1283 = vsel %vm115, %v1252, 0
    %1285 = vmatprep.subr.mxu0 0.0
    %1286 = vmatpush1.msra.mxu0 %v1146
    %1287 = vmatprep.subr.mxu0 0.0
    %1288 = vmatpush1.msra.mxu0 %v1151
    %1289 = vmatprep.subr.mxu0 0.0
    %1290 = vmatpush1.msra.mxu0 0.0
    %1291 = vmatprep.subr.mxu0 0.0
    %1292 = vmatpush1.msra.mxu0 0.0
    %1293 = vmatprep.subr.mxu0 0.0
    %1294 = vmatpush1.msra.mxu0 0.0
    %1295 = vmatprep.subr.mxu0 0.0
    %1296 = vmatpush1.msra.mxu0 0.0
    %1297 = vmatprep.subr.mxu0 0.0
    %1298 = vmatpush1.msra.mxu0 0.0
    %1299 = vmatprep.subr.mxu0 0.0
    %1300 = vmatpush1.msra.mxu0 0.0
    %1301 = vmatprep.subr.mxu0 0.0
    %1302 = vmatpush1.msra.mxu0 0.0
    %1303 = vmatprep.subr.mxu0 0.0
    %1304 = vmatpush1.msra.mxu0 0.0
    %1305 = vmatprep.subr.mxu0 0.0
    %1306 = vmatpush1.msra.mxu0 0.0
    %1307 = vmatprep.subr.mxu0 0.0
    %1308 = vmatpush1.msra.mxu0 0.0
    %1309 = vmatprep.subr.mxu0 0.0
    %1310 = vmatpush1.msra.mxu0 0.0
    %1311 = vmatprep.subr.mxu0 0.0
    %1312 = vmatpush1.msra.mxu0 0.0
    %1313 = vmatprep.subr.mxu0 0.0
    %1314 = vmatpush1.msra.mxu0 0.0
    %1315 = vmatprep.subr.mxu0 0.0
    %1316 = vmatpush1.msra.mxu0 0.0
    %1317 = vmatprep.subr.mxu0 0.0
    %1318 = vmatpush1.msra.mxu0 0.0
    %1319 = vmatprep.subr.mxu0 0.0
    %1320 = vmatpush1.msra.mxu0 0.0
    %1321 = vmatprep.subr.mxu0 0.0
    %1322 = vmatpush1.msra.mxu0 0.0
    %1323 = vmatprep.subr.mxu0 0.0
    %1324 = vmatpush1.msra.mxu0 0.0
    %1325 = vmatprep.subr.mxu0 0.0
    %1326 = vmatpush1.msra.mxu0 0.0
    %1327 = vmatprep.subr.mxu0 0.0
    %1328 = vmatpush1.msra.mxu0 0.0
    %1329 = vmatprep.subr.mxu0 0.0
    %1330 = vmatpush1.msra.mxu0 0.0
    %1331 = vmatprep.subr.mxu0 0.0
    %1332 = vmatpush1.msra.mxu0 0.0
    %1333 = vmatprep.subr.mxu0 0.0
    %1334 = vmatpush1.msra.mxu0 0.0
    %1335 = vmatprep.subr.mxu0 0.0
    %1336 = vmatpush1.msra.mxu0 0.0
    %1337 = vmatprep.subr.mxu0 0.0
    %1338 = vmatpush1.msra.mxu0 0.0
    %1339 = vmatprep.subr.mxu0 0.0
    %1340 = vmatpush1.msra.mxu0 0.0
    %1341 = vmatprep.subr.mxu0 0.0
    %1342 = vmatpush1.msra.mxu0 0.0
    %1343 = vmatprep.subr.mxu0 0.0
    %1344 = vmatpush1.msra.mxu0 0.0
    %1345 = vmatprep.subr.mxu0 0.0
    %1346 = vmatpush1.msra.mxu0 0.0
    %1347 = vmatprep.subr.mxu0 0.0
    %1348 = vmatpush1.msra.mxu0 0.0
    %1349 = vmatprep.mubr.f32.mxu0 0.0
    %1350 = vmatmul.mubr.f32.gmra.mrb[0].mxu0 %v1262
    %v1351 = vpop.f32.mrb[0].mxu0
    %v1352 = vadd.f32 0.0, %v1351
    %v1353 = vpop.f32.mrb[0].mxu0
    %1354 = vmatprep.mubr.f32.mxu0 0.0
    %1355 = vmatmul.mubr.f32.gmra.mrb[0].mxu0 %v1265
    %v1356 = vpop.f32.mrb[0].mxu0
    %v1357 = vadd.f32 0.0, %v1356
    %v1358 = vpop.f32.mrb[0].mxu0
    %1359 = vmatprep.mubr.f32.mxu0 0.0
    %1360 = vmatmul.mubr.f32.gmra.mrb[0].mxu0 %v1268
    %v1361 = vpop.f32.mrb[0].mxu0
    %v1362 = vadd.f32 0.0, %v1361
    %v1363 = vpop.f32.mrb[0].mxu0
    %1364 = vmatprep.mubr.f32.mxu0 0.0
    %1365 = vmatmul.mubr.f32.gmra.mrb[0].mxu0 %v1271
    %v1366 = vpop.f32.mrb[0].mxu0
    %v1367 = vadd.f32 0.0, %v1366
    %v1368 = vpop.f32.mrb[0].mxu0
    %1369 = vmatprep.mubr.f32.mxu0 0.0
    %1370 = vmatmul.mubr.f32.gmra.mrb[0].mxu0 %v1274
    %v1371 = vpop.f32.mrb[0].mxu0
    %v1372 = vadd.f32 0.0, %v1371
    %v1373 = vpop.f32.mrb[0].mxu0
    %1374 = vmatprep.mubr.f32.mxu0 0.0
    %1375 = vmatmul.mubr.f32.gmra.mrb[0].mxu0 %v1277
    %v1376 = vpop.f32.mrb[0].mxu0
    %v1377 = vadd.f32 0.0, %v1376
    %v1378 = vpop.f32.mrb[0].mxu0
    %1379 = vmatprep.mubr.f32.mxu0 0.0
    %1380 = vmatmul.mubr.f32.gmra.mrb[0].mxu0 %v1280
    %v1381 = vpop.f32.mrb[0].mxu0
    %v1382 = vadd.f32 0.0, %v1381
    %v1383 = vpop.f32.mrb[0].mxu0
    %1384 = vmatprep.mubr.f32.mxu0 0.0
    %1385 = vmatmul.mubr.f32.gmra.mrb[0].mxu0 %v1283
    %v1386 = vpop.f32.mrb[0].mxu0
    %v1387 = vadd.f32 0.0, %v1386
    %v1388 = vpop.f32.mrb[0].mxu0
    %1389 = vdwg.mxu0
    %v1390 = vsel %vm64, %v1352, -inf
    %1391 = vmax.xlane.f32.xlu0 %v1390
    %v1392 = vpop.xlane.xlu0 %1391
    %v1393 = vsel %vm64, %v1357, -inf
    %1394 = vmax.xlane.f32.xlu0 %v1393
    %v1395 = vpop.xlane.xlu0 %1394
    %v1396 = vsel %vm64, %v1362, -inf
    %1397 = vmax.xlane.f32.xlu0 %v1396
    %v1398 = vpop.xlane.xlu0 %1397
    %v1399 = vsel %vm64, %v1367, -inf
    %1400 = vmax.xlane.f32.xlu0 %v1399
    %v1401 = vpop.xlane.xlu0 %1400
    %v1402 = vsel %vm64, %v1372, -inf
    %1403 = vmax.xlane.f32.xlu0 %v1402
    %v1404 = vpop.xlane.xlu0 %1403
    %v1405 = vsel %vm64, %v1377, -inf
    %1406 = vmax.xlane.f32.xlu0 %v1405
    %v1407 = vpop.xlane.xlu0 %1406
    %v1408 = vsel %vm64, %v1382, -inf
    %1409 = vmax.xlane.f32.xlu0 %v1408
    %v1410 = vpop.xlane.xlu0 %1409
    %v1411 = vsel %vm64, %v1387, -inf
    %1412 = vmax.xlane.f32.xlu0 %v1411
    %v1413 = vpop.xlane.xlu0 %1412
    %v1414 = vsub.f32 %v1352, %v1392
    %v1415 = vsub.f32 %v1357, %v1395
    %v1416 = vsub.f32 %v1362, %v1398
    %v1417 = vsub.f32 %v1367, %v1401
    %v1418 = vsub.f32 %v1372, %v1404
    %v1419 = vsub.f32 %v1377, %v1407
    %v1420 = vsub.f32 %v1382, %v1410
    %v1421 = vsub.f32 %v1387, %v1413
    %v1422 = vmul.f32 %v1414, 1.442695
    %v1423 = vpow.pop %v1422
    %v1424 = vmul.f32 %v1415, 1.442695
    %v1425 = vpow.pop %v1424
    %v1426 = vmul.f32 %v1416, 1.442695
    %v1427 = vpow.pop %v1426
    %v1428 = vmul.f32 %v1417, 1.442695
    %v1429 = vpow.pop %v1428
    %v1430 = vmul.f32 %v1418, 1.442695
    %v1431 = vpow.pop %v1430
    %v1432 = vmul.f32 %v1419, 1.442695
    %v1433 = vpow.pop %v1432
    %v1434 = vmul.f32 %v1420, 1.442695
    %v1435 = vpow.pop %v1434
    %v1436 = vmul.f32 %v1421, 1.442695
    %v1437 = vpow.pop %v1436
    %v1438 = vsel %vm64, %v1423, 0.0
    %1439 = vadd.xlane.f32.xlu0 %v1438
    %v1440 = vpop.xlane.xlu0 %1439
    %v1441 = vsel %vm64, %v1425, 0.0
    %1442 = vadd.xlane.f32.xlu0 %v1441
    %v1443 = vpop.xlane.xlu0 %1442
    %v1444 = vsel %vm64, %v1427, 0.0
    %1445 = vadd.xlane.f32.xlu0 %v1444
    %v1446 = vpop.xlane.xlu0 %1445
    %v1447 = vsel %vm64, %v1429, 0.0
    %1448 = vadd.xlane.f32.xlu0 %v1447
    %v1449 = vpop.xlane.xlu0 %1448
    %v1450 = vsel %vm64, %v1431, 0.0
    %1451 = vadd.xlane.f32.xlu0 %v1450
    %v1452 = vpop.xlane.xlu0 %1451
    %v1453 = vsel %vm64, %v1433, 0.0
    %1454 = vadd.xlane.f32.xlu0 %v1453
    %v1455 = vpop.xlane.xlu0 %1454
    %v1456 = vsel %vm64, %v1435, 0.0
    %1457 = vadd.xlane.f32.xlu0 %v1456
    %v1458 = vpop.xlane.xlu0 %1457
    %v1459 = vsel %vm64, %v1437, 0.0
    %1460 = vadd.xlane.f32.xlu0 %v1459
    %v1461 = vpop.xlane.xlu0 %1460
    %v1462 = vrcp.pop %v1440
    %v1463 = vrcp.pop %v1443
    %v1464 = vrcp.pop %v1446
    %v1465 = vrcp.pop %v1449
    %v1466 = vrcp.pop %v1452
    %v1467 = vrcp.pop %v1455
    %v1468 = vrcp.pop %v1458
    %v1469 = vrcp.pop %v1461
    %v1470 = vmul.f32 %v1423, %v1462
    %v1471 = vmul.f32 %v1425, %v1463
    %v1472 = vmul.f32 %v1427, %v1464
    %v1473 = vmul.f32 %v1429, %v1465
    %v1474 = vmul.f32 %v1431, %v1466
    %v1475 = vmul.f32 %v1433, %v1467
    %v1476 = vmul.f32 %v1435, %v1468
    %v1477 = vmul.f32 %v1437, %v1469
    %v1479 = vsel %vm64, %v1221, 0
    %v1482 = vsel %vm64, %v1226, 0
    %v1485 = vsel %vm64, %v1470, 0
    %v1488 = vsel %vm64, %v1471, 0
    %v1491 = vsel %vm64, %v1472, 0
    %v1494 = vsel %vm64, %v1473, 0
    %v1497 = vsel %vm64, %v1474, 0
    %v1500 = vsel %vm64, %v1475, 0
    %v1503 = vsel %vm64, %v1476, 0
    %v1506 = vsel %vm64, %v1477, 0
    %1508 = vmatprep.subr.mxu0 0.0
    %1509 = vmatpush1.xpose.msra.mxu0 %v1485
    %1510 = vmatprep.subr.mxu0 0.0
    %1511 = vmatpush1.xpose.msra.mxu0 %v1488
    %1512 = vmatprep.subr.mxu0 0.0
    %1513 = vmatpush1.xpose.msra.mxu0 %v1491
    %1514 = vmatprep.subr.mxu0 0.0
    %1515 = vmatpush1.xpose.msra.mxu0 %v1494
    %1516 = vmatprep.subr.mxu0 0.0
    %1517 = vmatpush1.xpose.msra.mxu0 %v1497
    %1518 = vmatprep.subr.mxu0 0.0
    %1519 = vmatpush1.xpose.msra.mxu0 %v1500
    %1520 = vmatprep.subr.mxu0 0.0
    %1521 = vmatpush1.xpose.msra.mxu0 %v1503
    %1522 = vmatprep.subr.mxu0 0.0
    %1523 = vmatpush1.xpose.msra.mxu0 %v1506
    %1524 = vmatprep.subr.mxu0 0.0
    %1525 = vmatpush1.xpose.msra.mxu0 0.0
    %1526 = vmatprep.subr.mxu0 0.0
    %1527 = vmatpush1.xpose.msra.mxu0 0.0
    %1528 = vmatprep.subr.mxu0 0.0
    %1529 = vmatpush1.xpose.msra.mxu0 0.0
    %1530 = vmatprep.subr.mxu0 0.0
    %1531 = vmatpush1.xpose.msra.mxu0 0.0
    %1532 = vmatprep.subr.mxu0 0.0
    %1533 = vmatpush1.xpose.msra.mxu0 0.0
    %1534 = vmatprep.subr.mxu0 0.0
    %1535 = vmatpush1.xpose.msra.mxu0 0.0
    %1536 = vmatprep.subr.mxu0 0.0
    %1537 = vmatpush1.xpose.msra.mxu0 0.0
    %1538 = vmatprep.subr.mxu0 0.0
    %1539 = vmatpush1.xpose.msra.mxu0 0.0
    %1540 = vmatprep.subr.mxu0 0.0
    %1541 = vmatpush1.xpose.msra.mxu0 0.0
    %1542 = vmatprep.subr.mxu0 0.0
    %1543 = vmatpush1.xpose.msra.mxu0 0.0
    %1544 = vmatprep.subr.mxu0 0.0
    %1545 = vmatpush1.xpose.msra.mxu0 0.0
    %1546 = vmatprep.subr.mxu0 0.0
    %1547 = vmatpush1.xpose.msra.mxu0 0.0
    %1548 = vmatprep.subr.mxu0 0.0
    %1549 = vmatpush1.xpose.msra.mxu0 0.0
    %1550 = vmatprep.subr.mxu0 0.0
    %1551 = vmatpush1.xpose.msra.mxu0 0.0
    %1552 = vmatprep.subr.mxu0 0.0
    %1553 = vmatpush1.xpose.msra.mxu0 0.0
    %1554 = vmatprep.subr.mxu0 0.0
    %1555 = vmatpush1.xpose.msra.mxu0 0.0
    %1556 = vmatprep.subr.mxu0 0.0
    %1557 = vmatpush1.xpose.msra.mxu0 0.0
    %1558 = vmatprep.subr.mxu0 0.0
    %1559 = vmatpush1.xpose.msra.mxu0 0.0
    %1560 = vmatprep.subr.mxu0 0.0
    %1561 = vmatpush1.xpose.msra.mxu0 0.0
    %1562 = vmatprep.subr.mxu0 0.0
    %1563 = vmatpush1.xpose.msra.mxu0 0.0
    %1564 = vmatprep.subr.mxu0 0.0
    %1565 = vmatpush1.xpose.msra.mxu0 0.0
    %1566 = vmatprep.subr.mxu0 0.0
    %1567 = vmatpush1.xpose.msra.mxu0 0.0
    %1568 = vmatprep.subr.mxu0 0.0
    %1569 = vmatpush1.xpose.msra.mxu0 0.0
    %1570 = vmatprep.subr.mxu0 0.0
    %1571 = vmatpush1.xpose.msra.mxu0 0.0
    %1572 = vmatprep.mubr.f32.mxu0 0.0
    %1573 = vmatmul.mubr.f32.gmra.mrb[0].mxu0 %v1479
    %v1574 = vpop.f32.mrb[0].mxu0
    %v1575 = vadd.f32 0.0, %v1574
    %v1576 = vpop.f32.mrb[0].mxu0
    %1577 = vmatprep.mubr.f32.mxu0 0.0
    %1578 = vmatmul.mubr.f32.gmra.mrb[0].mxu0 %v1482
    %v1579 = vpop.f32.mrb[0].mxu0
    %v1580 = vadd.f32 0.0, %v1579
    %v1581 = vpop.f32.mrb[0].mxu0
    %1582 = vdwg.mxu0
    %v1583 = vmax.f32 %v1575, 0.0
    %v1584 = vmax.f32 %v1580, 0.0
    %v1585 = vmax.f32 %v962, 0.0
    %v1586 = vmax.f32 %v963, 0.0
    %1587 = vmatprep.subr.mxu0 0.0
    %1588 = vmatpush1.msra.mxu0 %v1585
    %1589 = vmatprep.subr.mxu0 0.0
    %1590 = vmatpush1.msra.mxu0 %v1586
    %1591 = vmatprep.subr.mxu0 0.0
    %1592 = vmatpush1.msra.mxu0 0.0
    %1593 = vmatprep.subr.mxu0 0.0
    %1594 = vmatpush1.msra.mxu0 0.0
    %1595 = vmatprep.subr.mxu0 0.0
    %1596 = vmatpush1.msra.mxu0 0.0
    %1597 = vmatprep.subr.mxu0 0.0
    %1598 = vmatpush1.msra.mxu0 0.0
    %1599 = vmatprep.subr.mxu0 0.0
    %1600 = vmatpush1.msra.mxu0 0.0
    %1601 = vmatprep.subr.mxu0 0.0
    %1602 = vmatpush1.msra.mxu0 0.0
    %1603 = vmatprep.subr.mxu0 0.0
    %1604 = vmatpush1.msra.mxu0 0.0
    %1605 = vmatprep.subr.mxu0 0.0
    %1606 = vmatpush1.msra.mxu0 0.0
    %1607 = vmatprep.subr.mxu0 0.0
    %1608 = vmatpush1.msra.mxu0 0.0
    %1609 = vmatprep.subr.mxu0 0.0
    %1610 = vmatpush1.msra.mxu0 0.0
    %1611 = vmatprep.subr.mxu0 0.0
    %1612 = vmatpush1.msra.mxu0 0.0
    %1613 = vmatprep.subr.mxu0 0.0
    %1614 = vmatpush1.msra.mxu0 0.0
    %1615 = vmatprep.subr.mxu0 0.0
    %1616 = vmatpush1.msra.mxu0 0.0
    %1617 = vmatprep.subr.mxu0 0.0
    %1618 = vmatpush1.msra.mxu0 0.0
    %1619 = vmatprep.subr.mxu0 0.0
    %1620 = vmatpush1.msra.mxu0 0.0
    %1621 = vmatprep.subr.mxu0 0.0
    %1622 = vmatpush1.msra.mxu0 0.0
    %1623 = vmatprep.subr.mxu0 0.0
    %1624 = vmatpush1.msra.mxu0 0.0
    %1625 = vmatprep.subr.mxu0 0.0
    %1626 = vmatpush1.msra.mxu0 0.0
    %1627 = vmatprep.subr.mxu0 0.0
    %1628 = vmatpush1.msra.mxu0 0.0
    %1629 = vmatprep.subr.mxu0 0.0
    %1630 = vmatpush1.msra.mxu0 0.0
    %1631 = vmatprep.subr.mxu0 0.0
    %1632 = vmatpush1.msra.mxu0 0.0
    %1633 = vmatprep.subr.mxu0 0.0
    %1634 = vmatpush1.msra.mxu0 0.0
    %1635 = vmatprep.subr.mxu0 0.0
    %1636 = vmatpush1.msra.mxu0 0.0
    %1637 = vmatprep.subr.mxu0 0.0
    %1638 = vmatpush1.msra.mxu0 0.0
    %1639 = vmatprep.subr.mxu0 0.0
    %1640 = vmatpush1.msra.mxu0 0.0
    %1641 = vmatprep.subr.mxu0 0.0
    %1642 = vmatpush1.msra.mxu0 0.0
    %1643 = vmatprep.subr.mxu0 0.0
    %1644 = vmatpush1.msra.mxu0 0.0
    %1645 = vmatprep.subr.mxu0 0.0
    %1646 = vmatpush1.msra.mxu0 0.0
    %1647 = vmatprep.subr.mxu0 0.0
    %1648 = vmatpush1.msra.mxu0 0.0
    %1649 = vmatprep.subr.mxu0 0.0
    %1650 = vmatpush1.msra.mxu0 0.0
    %1651 = vmatprep.mubr.f32.mxu0 0.0
    %1652 = vmatmul.mubr.f32.gmra.mrb[0].mxu0 %v738
    %v1653 = vpop.f32.mrb[0].mxu0
    %v1654 = vadd.f32 0.0, %v1653
    %v1655 = vpop.f32.mrb[0].mxu0
    %1656 = vmatprep.mubr.f32.mxu0 0.0
    %1657 = vmatmul.mubr.f32.gmra.mrb[0].mxu0 %v741
    %v1658 = vpop.f32.mrb[0].mxu0
    %v1659 = vadd.f32 0.0, %v1658
    %v1660 = vpop.f32.mrb[0].mxu0
    %1661 = vmatprep.mubr.f32.mxu0 0.0
    %1662 = vmatmul.mubr.f32.gmra.mrb[0].mxu0 %v744
    %v1663 = vpop.f32.mrb[0].mxu0
    %v1664 = vadd.f32 0.0, %v1663
    %v1665 = vpop.f32.mrb[0].mxu0
    %1666 = vmatprep.mubr.f32.mxu0 0.0
    %1667 = vmatmul.mubr.f32.gmra.mrb[0].mxu0 %v747
    %v1668 = vpop.f32.mrb[0].mxu0
    %v1669 = vadd.f32 0.0, %v1668
    %v1670 = vpop.f32.mrb[0].mxu0
    %1671 = vdwg.mxu0
    %1672 = vmatprep.subr.mxu0 0.0
    %1673 = vmatpush1.msra.mxu0 %v1583
    %1674 = vmatprep.subr.mxu0 0.0
    %1675 = vmatpush1.msra.mxu0 %v1584
    %1676 = vmatprep.subr.mxu0 0.0
    %1677 = vmatpush1.msra.mxu0 0.0
    %1678 = vmatprep.subr.mxu0 0.0
    %1679 = vmatpush1.msra.mxu0 0.0
    %1680 = vmatprep.subr.mxu0 0.0
    %1681 = vmatpush1.msra.mxu0 0.0
    %1682 = vmatprep.subr.mxu0 0.0
    %1683 = vmatpush1.msra.mxu0 0.0
    %1684 = vmatprep.subr.mxu0 0.0
    %1685 = vmatpush1.msra.mxu0 0.0
    %1686 = vmatprep.subr.mxu0 0.0
    %1687 = vmatpush1.msra.mxu0 0.0
    %1688 = vmatprep.subr.mxu0 0.0
    %1689 = vmatpush1.msra.mxu0 0.0
    %1690 = vmatprep.subr.mxu0 0.0
    %1691 = vmatpush1.msra.mxu0 0.0
    %1692 = vmatprep.subr.mxu0 0.0
    %1693 = vmatpush1.msra.mxu0 0.0
    %1694 = vmatprep.subr.mxu0 0.0
    %1695 = vmatpush1.msra.mxu0 0.0
    %1696 = vmatprep.subr.mxu0 0.0
    %1697 = vmatpush1.msra.mxu0 0.0
    %1698 = vmatprep.subr.mxu0 0.0
    %1699 = vmatpush1.msra.mxu0 0.0
    %1700 = vmatprep.subr.mxu0 0.0
    %1701 = vmatpush1.msra.mxu0 0.0
    %1702 = vmatprep.subr.mxu0 0.0
    %1703 = vmatpush1.msra.mxu0 0.0
    %1704 = vmatprep.subr.mxu0 0.0
    %1705 = vmatpush1.msra.mxu0 0.0
    %1706 = vmatprep.subr.mxu0 0.0
    %1707 = vmatpush1.msra.mxu0 0.0
    %1708 = vmatprep.subr.mxu0 0.0
    %1709 = vmatpush1.msra.mxu0 0.0
    %1710 = vmatprep.subr.mxu0 0.0
    %1711 = vmatpush1.msra.mxu0 0.0
    %1712 = vmatprep.subr.mxu0 0.0
    %1713 = vmatpush1.msra.mxu0 0.0
    %1714 = vmatprep.subr.mxu0 0.0
    %1715 = vmatpush1.msra.mxu0 0.0
    %1716 = vmatprep.subr.mxu0 0.0
    %1717 = vmatpush1.msra.mxu0 0.0
    %1718 = vmatprep.subr.mxu0 0.0
    %1719 = vmatpush1.msra.mxu0 0.0
    %1720 = vmatprep.subr.mxu0 0.0
    %1721 = vmatpush1.msra.mxu0 0.0
    %1722 = vmatprep.subr.mxu0 0.0
    %1723 = vmatpush1.msra.mxu0 0.0
    %1724 = vmatprep.subr.mxu0 0.0
    %1725 = vmatpush1.msra.mxu0 0.0
    %1726 = vmatprep.subr.mxu0 0.0
    %1727 = vmatpush1.msra.mxu0 0.0
    %1728 = vmatprep.subr.mxu0 0.0
    %1729 = vmatpush1.msra.mxu0 0.0
    %1730 = vmatprep.subr.mxu0 0.0
    %1731 = vmatpush1.msra.mxu0 0.0
    %1732 = vmatprep.subr.mxu0 0.0
    %1733 = vmatpush1.msra.mxu0 0.0
    %1734 = vmatprep.subr.mxu0 0.0
    %1735 = vmatpush1.msra.mxu0 0.0
    %1736 = vmatprep.mubr.f32.mxu0 0.0
    %1737 = vmatmul.mubr.f32.gmra.mrb[0].mxu0 %v835
    %v1738 = vpop.f32.mrb[0].mxu0
    %v1739 = vadd.f32 %v1654, %v1738
    %v1740 = vpop.f32.mrb[0].mxu0
    %1741 = vmatprep.mubr.f32.mxu0 0.0
    %1742 = vmatmul.mubr.f32.gmra.mrb[0].mxu0 %v838
    %v1743 = vpop.f32.mrb[0].mxu0
    %v1744 = vadd.f32 %v1659, %v1743
    %v1745 = vpop.f32.mrb[0].mxu0
    %1746 = vmatprep.mubr.f32.mxu0 0.0
    %1747 = vmatmul.mubr.f32.gmra.mrb[0].mxu0 %v841
    %v1748 = vpop.f32.mrb[0].mxu0
    %v1749 = vadd.f32 %v1664, %v1748
    %v1750 = vpop.f32.mrb[0].mxu0
    %1751 = vmatprep.mubr.f32.mxu0 0.0
    %1752 = vmatmul.mubr.f32.gmra.mrb[0].mxu0 %v844
    %v1753 = vpop.f32.mrb[0].mxu0
    %v1754 = vadd.f32 %v1669, %v1753
    %v1755 = vpop.f32.mrb[0].mxu0
    %1756 = vdwg.mxu0
    %v1757 = vadd.f32 %v1739, %v934
    %v1758 = vadd.f32 %v1744, %v939
    %v1759 = vadd.f32 %v1749, %v944
    %v1760 = vadd.f32 %v1754, %v949
    %s1761 = scalar_lea.vmem [#allocation2], 32
    %1762 = vst.msk [vmem:[%s1761] sm:$0xff] %vm64, %v1757
    %1763 = vst.msk [vmem:[%s1761 + $0x8] sm:$0xff] %vm64, %v1758
    %1764 = vst.msk [vmem:[%s1761 + $0x10] sm:$0xff] %vm64, %v1759
    %1765 = vst.msk [vmem:[%s1761 + $0x18] sm:$0xff] %vm64, %v1760
    // Predicated region
    $region42: #{tpu_custom_call.1} parent=1 // pred_check
      _
    $region43: #{tpu_custom_call.1} parent=1 // pred_check_branch
      %1767 = sbr.rel (0) target = $region45
    $region44: #{tpu_custom_call.1} parent=1 // pred_region
      %s1769 = ssub.s32 1024, 1024
      %1770 = vsyncadd [#allocation3], %s1769
      %s1771 = sshll.u32 [#allocation2], 4
      %s1772 = int_to_ptr.vmem [resolvable:$true] %s1771
      %1777 = dma.vmem_to_hbm [thread:$0]  %s1772, 1024, %s10, [#allocation3], 128, 128, 8
    $region45: #{tpu_custom_call.1} parent=1 // pred_fallthru
      _
    // Predicated region
    $region46: #{tpu_custom_call.1} parent=1 // pred_check
      _
    $region47: #{tpu_custom_call.1} parent=1 // pred_check_branch
      %1779 = sbr.rel (0) target = $region49
    $region48: #{tpu_custom_call.1} parent=1 // pred_region
      %1780 = dma.done [#allocation3], 1024
    $region49: #{tpu_custom_call.1} parent=1 // pred_fallthru
      _
    %1781 = vsyncpa [#allocation3], 1

</llo_original>
